<compile_context>
chip_gen: v7x
topology: tpu7x:2x2x1
jax: 0.10.0
libtpu: 0.0.40
codegen_flags: <defaults>
</compile_context>

<pallas_src>
import jax
import jax.numpy as jnp
from jax import lax
from jax.experimental import pallas as pl
from jax.experimental.pallas import tpu as pltpu

# ---------------- model dims (small stand-ins; 1024 in the original .view()
# corresponds to VISUAL_DIM, so we parameterize it) ----------------
VISUAL_DIM = 32   # cfg.INPUT.VISUAL_DIM
VISUAL_OUT = 16   # cfg.INPUT.VISUAL_OUT
TEXT_DIM   = 24   # cfg.INPUT.TEXT_DIM
TEXT_OUT   = 16   # cfg.INPUT.TEXT_OUT
DIM_STATE  = 32   # cfg.MODEL.DIM_STATE
PRE_IN     = VISUAL_OUT * 2 + TEXT_OUT * 2          # 64
PROJ_IN    = DIM_STATE * 2                          # 64  (arch == 'mlp')
CTX_W      = 128                                    # lane-dense packed [video_seg|text_seg|0]

_VMEM = pl.BlockSpec(memory_space=pltpu.MemorySpace.VMEM)
_SMEM = pl.BlockSpec(memory_space=pltpu.MemorySpace.SMEM)


# ================= Kernel 1: batched Linear->ReLU->Linear (MLP1 / MLP) =================
def _mlp_kernel(x_ref, w1_ref, b1_ref, w2_ref, b2_ref, o_ref):
    x = x_ref[...]
    h = jnp.maximum(
        jnp.dot(x, w1_ref[...], preferred_element_type=jnp.float32) + b1_ref[...], 0.0)
    o_ref[...] = (jnp.dot(h, w2_ref[...], preferred_element_type=jnp.float32)
                  + b2_ref[...]).astype(o_ref.dtype)


def mlp_apply(x, params):
    """Apply Linear->ReLU->Linear on a (rows, in) matrix in one pallas_call."""
    w1, b1, w2, b2 = params
    return pl.pallas_call(
        _mlp_kernel,
        out_shape=jax.ShapeDtypeStruct((x.shape[0], w2.shape[1]), jnp.float32),
        in_specs=[_VMEM] * 5,
        out_specs=_VMEM,
    )(x, w1, b1, w2, b2)


# ================= Kernel 2: fused segment + paragraph pooling =================
def _pool_kernel(video_ref, para_ref, rs_ref, hand_ref, ts_ref, ctx_ref):
    T = video_ref.shape[0]
    P = para_ref.shape[0]

    # softmax over paragraph scores along sublanes (VPU/XLU, no MXU)
    rs = rs_ref[...]                                            # (P, 1)
    rs = rs - jnp.max(rs, axis=0, keepdims=True)
    ers = jnp.exp(rs)
    sw = ers / jnp.sum(ers, axis=0, keepdims=True)              # (P, 1)

    text_seg = jnp.sum(sw * para_ref[...], axis=0, keepdims=True)   # (1, TEXT_OUT)

    hs = hand_ref[...]                                          # (T, 1)
    video = video_ref[...]                                      # (T, VISUAL_OUT)
    idx = lax.broadcasted_iota(jnp.int32, (T, 1), 0)

    segs = []
    for p in range(P):                                          # P is static, small
        s = ts_ref[2 * p]
        e = ts_ref[2 * p + 1]
        in_win = jnp.logical_and(idx >= s, idx < e)
        hs_m = jnp.where(in_win, hs, -1e30)
        m = jnp.max(hs_m, axis=0, keepdims=True)
        ex = jnp.where(in_win, jnp.exp(hs_m - m), 0.0)
        w_soft = ex / jnp.sum(ex, axis=0, keepdims=True)
        w_onehot = (idx == s).astype(jnp.float32)               # s >= e path: video[s]
        w = jnp.where(s >= e, w_onehot, w_soft)                 # (T, 1)
        segs.append(jnp.sum(w * video, axis=0, keepdims=True))  # (1, VISUAL_OUT)

    vstack = jnp.concatenate(segs, axis=0)                      # (P, VISUAL_OUT)
    video_seg = jnp.sum(sw * vstack, axis=0, keepdims=True)     # (1, VISUAL_OUT)

    pad = jnp.zeros((1, CTX_W - VISUAL_OUT - TEXT_OUT), jnp.float32)
    # single lane-dense (1,128) store: [video_seg | text_seg | zeros]
    ctx_ref[...] = jnp.concatenate([video_seg, text_seg, pad], axis=1)


def pool_segments(video_t, para_t, raw_score, hand_score, ts_flat):
    return pl.pallas_call(
        _pool_kernel,
        out_shape=jax.ShapeDtypeStruct((1, CTX_W), jnp.float32),
        in_specs=[_VMEM, _VMEM, _VMEM, _VMEM, _SMEM],
        out_specs=_VMEM,
    )(video_t, para_t,
      raw_score.reshape(-1, 1).astype(jnp.float32),
      hand_score.reshape(-1, 1).astype(jnp.float32),
      ts_flat.astype(jnp.int32))


# ================= Kernel 3: fused step loop (grid over steps, state in scratch) ========
def _step_kernel(at_ref, ab_ref, q_ref, ctx_ref, st0_ref,
                 w1p_ref, b1p_ref, w2p_ref, b2p_ref,
                 w1q_ref, b1q_ref, w2q_ref, b2q_ref,
                 o_ref, state_sc):
    @pl.when(pl.program_id(0) == 0)
    def _():
        state_sc[...] = st0_ref[...]

    A = at_ref.shape[1]
    a_texts = at_ref[0]                                          # (A, TEXT_OUT)
    a_btn   = ab_ref[0]                                          # (A, VISUAL_OUT)
    qa = q_ref[...] + a_texts                                    # (A, TEXT_OUT)

    ctx = ctx_ref[...]                                           # (1, 128)
    vseg = ctx[:, :VISUAL_OUT]
    tseg = ctx[:, VISUAL_OUT:VISUAL_OUT + TEXT_OUT]

    inputs = jnp.concatenate([
        jnp.broadcast_to(vseg, (A, VISUAL_OUT)),
        jnp.broadcast_to(tseg, (A, TEXT_OUT)),
        qa, a_btn], axis=1)                                      # (A, PRE_IN)

    h = jnp.maximum(
        jnp.dot(inputs, w1p_ref[...], preferred_element_type=jnp.float32) + b1p_ref[...], 0.0)
    pre = jnp.dot(h, w2p_ref[...], preferred_element_type=jnp.float32) + b2p_ref[...]  # (A, DIM_STATE)

    states = jnp.concatenate(
        [pre, jnp.broadcast_to(state_sc[...], (A, DIM_STATE))], axis=1)                # (A, 2*DIM_STATE)
    h2 = jnp.maximum(
        jnp.dot(states, w1q_ref[...], preferred_element_type=jnp.float32) + b1q_ref[...], 0.0)
    logits = jnp.dot(h2, w2q_ref[...], preferred_element_type=jnp.float32) + b2q_ref[...]  # (A, 1)

    o_ref[...] = logits[None].astype(o_ref.dtype)                # (1, A, 1)

    # history_val == 'max': state <- mlp_pre_output[argmax(logits)]  (first max on ties)
    rows = lax.broadcasted_iota(jnp.int32, (A, 1), 0).astype(jnp.float32)
    lmax = jnp.max(logits, axis=0, keepdims=True)
    best = jnp.min(jnp.where(logits >= lmax, rows, float(A)), axis=0, keepdims=True)
    onehot = (rows == best).astype(jnp.float32)                  # (A, 1)
    state_sc[...] = jnp.sum(onehot * pre, axis=0, keepdims=True)


def step_loop(ctx, question_t, a_texts_t, a_btn_t, init_state, pre_p, proj_p):
    STEPS, A, _ = a_texts_t.shape
    w1p, b1p, w2p, b2p = pre_p
    w1q, b1q, w2q, b2q = proj_p

    def const_spec(arr):
        nd = arr.ndim
        return pl.BlockSpec(arr.shape, lambda s, _nd=nd: (0,) * _nd)

    grid_spec = pltpu.PrefetchScalarGridSpec(
        num_scalar_prefetch=0,
        grid=(STEPS,),
        in_specs=[
            pl.BlockSpec((1, A, TEXT_OUT),   lambda s: (s, 0, 0)),
            pl.BlockSpec((1, A, VISUAL_OUT), lambda s: (s, 0, 0)),
            const_spec(question_t),
            const_spec(ctx),
            const_spec(init_state),
            const_spec(w1p), const_spec(b1p), const_spec(w2p), const_spec(b2p),
            const_spec(w1q), const_spec(b1q), const_spec(w2q), const_spec(b2q),
        ],
        out_specs=pl.BlockSpec((1, A, 1), lambda s: (s, 0, 0)),
        scratch_shapes=[pltpu.VMEM((1, DIM_STATE), jnp.float32)],
    )
    return pl.pallas_call(
        _step_kernel,
        out_shape=jax.ShapeDtypeStruct((STEPS, A, 1), jnp.float32),
        grid_spec=grid_spec,
        compiler_params=pltpu.CompilerParams(dimension_semantics=("arbitrary",)),
    )(a_texts_t, a_btn_t, question_t, ctx, init_state,
      w1p, b1p, w2p, b2p, w1q, b1q, w2q, b2q)


# ---------------- deterministic parameter init ----------------
def _linear_params(key, din, dout, scale=0.2):
    kw, kb = jax.random.split(key)
    w = scale * jax.random.normal(kw, (din, dout), jnp.float32)
    b = scale * jax.random.normal(kb, (1, dout), jnp.float32)
    return w, b


def _mlp1_params(key, din, dout):
    k1, k2 = jax.random.split(key)
    w1, b1 = _linear_params(k1, din, din)
    w2, b2 = _linear_params(k2, din, dout)
    return (w1, b1, w2, b2)


def _mlp_params(key, din, dout):
    k1, k2 = jax.random.split(key)
    w1, b1 = _linear_params(k1, din, 4 * din)
    w2, b2 = _linear_params(k2, 4 * din, dout)
    return (w1, b1, w2, b2)


def init_model(key):
    k = jax.random.split(key, 5)
    return {
        "mlp_v":   _mlp1_params(k[0], VISUAL_DIM, VISUAL_OUT),
        "mlp_t":   _mlp1_params(k[1], TEXT_DIM, TEXT_OUT),
        "mlp_pre": _mlp1_params(k[2], PRE_IN, DIM_STATE),
        "proj":    _mlp_params(k[3], PROJ_IN, 1),           # arch == 'mlp'
        "state":   jax.random.normal(k[4], (1, DIM_STATE), jnp.float32),
    }


# ---------------- jitted per-element forward ----------------
@jax.jit
def forward_element(params, video, para, question, a_texts_all, a_buttons_all,
                    raw_score, hand_score, ts_flat):
    P = para.shape[0]
    T = video.shape[0]
    STEPS, A, _ = a_texts_all.shape

    # one batched mlp_t: [para ; question ; all action texts]
    text_in = jnp.concatenate(
        [para, question, a_texts_all.reshape(STEPS * A, TEXT_DIM)], axis=0)
    text_out = mlp_apply(text_in, params["mlp_t"])
    para_t = text_out[:P]
    question_t = text_out[P:P + 1]
    a_texts_t = text_out[P + 1:].reshape(STEPS, A, TEXT_OUT)

    # one batched mlp_v: [video ; all action buttons]
    vis_in = jnp.concatenate(
        [video, a_buttons_all.reshape(STEPS * A, VISUAL_DIM)], axis=0)
    vis_out = mlp_apply(vis_in, params["mlp_v"])
    video_t = vis_out[:T]
    a_btn_t = vis_out[T:].reshape(STEPS, A, VISUAL_OUT)

    # fused segment + paragraph pooling -> packed (1, 128) context row
    ctx = pool_segments(video_t, para_t, raw_score, hand_score, ts_flat)

    # fused step loop with carried state
    logits = step_loop(ctx, question_t, a_texts_t, a_btn_t,
                       params["state"], params["mlp_pre"], params["proj"])
    return logits[..., 0]                                        # (STEPS, A)


# ---------------- forward (eval path of Q2A_Interaction_clip) ----------------
def forward(params, batch):
    results = []
    for (video, para, question, actions, meta) in batch:
        raw_score = jnp.asarray(meta["paras_score"], jnp.float32)
        hand_score = jnp.asarray(meta["hand_score"], jnp.float32)
        ts_flat = jnp.asarray(
            [v for se in meta["paras_timestamp"] for v in se], jnp.int32)
        a_texts_all = jnp.stack(
            [jnp.concatenate([a["text"] for a in step], axis=0) for step in actions], axis=0)
        a_buttons_all = jnp.stack(
            [jnp.stack([a["button"] for a in step], axis=0) for step in actions], axis=0)

        scores = forward_element(params, video, para, question,
                                 a_texts_all, a_buttons_all,
                                 raw_score, hand_score, ts_flat)
        meta = dict(meta)
        meta["scores"] = scores                                  # (STEPS, A)
        results.append(meta)
    return results


# ---------------- pure-JAX reference (matches the PyTorch module semantics) ----------------
def _mlp_ref(x, p):
    w1, b1, w2, b2 = p
    hp = jax.lax.Precision.HIGHEST
    h = jnp.maximum(jnp.dot(x, w1, precision=hp) + b1, 0.0)
    return jnp.dot(h, w2, precision=hp) + b2


def reference_forward(params, video, para, question, actions, meta):
    raw_score = jnp.asarray(meta["paras_score"], jnp.float32)
    hand_score = jnp.asarray(meta["hand_score"], jnp.float32)
    sw = jax.nn.softmax(raw_score)

    para_t = _mlp_ref(para, params["mlp_t"])
    text_seg = jnp.sum(sw[:, None] * para_t, axis=0)
    video_t = _mlp_ref(video, params["mlp_v"])

    segs = []
    for (s, e) in meta["paras_timestamp"]:
        if s >= e:
            segs.append(video_t[s])
        else:
            w = jax.nn.softmax(hand_score[s:e])
            segs.append(jnp.sum(w[:, None] * video_t[s:e], axis=0))
    video_seg = jnp.sum(sw[:, None] * jnp.stack(segs), axis=0)

    question_t = _mlp_ref(question, params["mlp_t"])
    state = params["state"]                                      # (1, DIM_STATE)
    scores = []
    for step in actions:
        a_texts = jnp.concatenate([a["text"] for a in step], axis=0)
        a_buttons = jnp.stack([a["button"] for a in step], axis=0)
        A = a_buttons.shape[0]
        at = _mlp_ref(a_texts, params["mlp_t"])
        ab = _mlp_ref(a_buttons, params["mlp_v"])
        qa = question_t + at
        inputs = jnp.concatenate([jnp.broadcast_to(video_seg, (A, VISUAL_OUT)),
                                  jnp.broadcast_to(text_seg, (A, TEXT_OUT)),
                                  qa, ab], axis=1)
        pre = _mlp_ref(inputs, params["mlp_pre"])
        states = jnp.concatenate([pre, jnp.broadcast_to(state, (A, DIM_STATE))], axis=1)
        logits = _mlp_ref(states, params["proj"]).reshape(-1)
        scores.append(logits)
        state = pre[jnp.argmax(logits)][None]
    return jnp.stack(scores)


# ---------------- example run ----------------
if __name__ == "__main__":
    key = jax.random.PRNGKey(0)
    kp, kd = jax.random.split(key)
    params = init_model(kp)

    T, P, STEPS, A = 10, 3, 2, 4
    keys = jax.random.split(kd, 8)
    video    = jax.random.normal(keys[0], (T, VISUAL_DIM), jnp.float32)
    para     = jax.random.normal(keys[1], (P, TEXT_DIM), jnp.float32)
    question = jax.random.normal(keys[2], (1, TEXT_DIM), jnp.float32)
    meta = {
        "paras_score":     jax.random.normal(keys[3], (P,), jnp.float32),
        "paras_timestamp": [(0, 4), (4, 4), (4, 10)],   # middle one hits s >= e path
        "hand_score":      jax.random.normal(keys[4], (T,), jnp.float32),
    }
    akeys = jax.random.split(keys[5], STEPS * A * 2).reshape(STEPS, A, 2, 2)
    actions = [
        [{"text":   jax.random.normal(akeys[s, a, 0], (1, TEXT_DIM), jnp.float32),
          "button": jax.random.normal(akeys[s, a, 1], (VISUAL_DIM,), jnp.float32)}
         for a in range(A)]
        for s in range(STEPS)
    ]

    batch = [(video, para, question, actions, meta)]
    results = forward(params, batch)
    scores = results[0]["scores"]                    # (STEPS, A)
    jax.block_until_ready(scores)
    assert scores.shape == (STEPS, A) and bool(jnp.all(jnp.isfinite(scores)))

    ref = reference_forward(params, video, para, question, actions, meta)
    assert jnp.allclose(scores, ref, rtol=2e-2, atol=2e-2), (scores, ref)

    print("KERNEL_OK")
</pallas_src>

<mosaic_0001>
module attributes {stable_mosaic.version = 11 : i64} {
  func.func @_mlp_kernel(%arg0: memref<12x24xf32, #tpu.memory_space<vmem>>, %arg1: memref<24x24xf32, #tpu.memory_space<vmem>>, %arg2: memref<1x24xf32, #tpu.memory_space<vmem>>, %arg3: memref<24x16xf32, #tpu.memory_space<vmem>>, %arg4: memref<1x16xf32, #tpu.memory_space<vmem>>, %arg5: memref<12x16xf32, #tpu.memory_space<vmem>>) attributes {dimension_semantics = [], scalar_prefetch = 0 : i64, scratch_operands = 0 : i64, tpu.core_type = #tpu.core_type<tc>} {
    %c0 = arith.constant 0 : index
    %c0_0 = arith.constant 0 : index
    %0 = vector.load %arg0[%c0, %c0_0] : memref<12x24xf32, #tpu.memory_space<vmem>>, vector<12x24xf32>
    %c0_1 = arith.constant 0 : index
    %c0_2 = arith.constant 0 : index
    %1 = vector.load %arg1[%c0_1, %c0_2] : memref<24x24xf32, #tpu.memory_space<vmem>>, vector<24x24xf32>
    %cst = arith.constant dense<0.000000e+00> : vector<12x24xf32>
    %2 = tpu.matmul %0, %1, %cst {dimension_numbers = #tpu.dot_dimension_numbers<[1], [0], [0], [1], [0, 0, 1, 1], [], []>} : vector<12x24xf32>, vector<24x24xf32>, vector<12x24xf32> -> vector<12x24xf32>
    %c0_3 = arith.constant 0 : index
    %c0_4 = arith.constant 0 : index
    %3 = vector.load %arg2[%c0_3, %c0_4] : memref<1x24xf32, #tpu.memory_space<vmem>>, vector<1x24xf32>
    %4 = vector.broadcast %3 : vector<1x24xf32> to vector<12x24xf32>
    %5 = arith.addf %2, %4 : vector<12x24xf32>
    %cst_5 = arith.constant 0.000000e+00 : f32
    %6 = vector.broadcast %cst_5 : f32 to vector<12x24xf32>
    %7 = arith.maximumf %5, %6 : vector<12x24xf32>
    %c0_6 = arith.constant 0 : index
    %c0_7 = arith.constant 0 : index
    %8 = vector.load %arg3[%c0_6, %c0_7] : memref<24x16xf32, #tpu.memory_space<vmem>>, vector<24x16xf32>
    %cst_8 = arith.constant dense<0.000000e+00> : vector<12x16xf32>
    %9 = tpu.matmul %7, %8, %cst_8 {dimension_numbers = #tpu.dot_dimension_numbers<[1], [0], [0], [1], [0, 0, 1, 1], [], []>} : vector<12x24xf32>, vector<24x16xf32>, vector<12x16xf32> -> vector<12x16xf32>
    %c0_9 = arith.constant 0 : index
    %c0_10 = arith.constant 0 : index
    %10 = vector.load %arg4[%c0_9, %c0_10] : memref<1x16xf32, #tpu.memory_space<vmem>>, vector<1x16xf32>
    %11 = vector.broadcast %10 : vector<1x16xf32> to vector<12x16xf32>
    %12 = arith.addf %9, %11 : vector<12x16xf32>
    %c0_11 = arith.constant 0 : index
    %c0_12 = arith.constant 0 : index
    %13 = vector.load %arg5[%c0_11, %c0_12] : memref<12x16xf32, #tpu.memory_space<vmem>>, vector<12x16xf32>
    tpu.vector_store %arg5[%c0_11, %c0_12], %12 {strides = array<i32>} : memref<12x16xf32, #tpu.memory_space<vmem>>, vector<12x16xf32>,
    return
  }
}

module attributes {stable_mosaic.version = 11 : i64} {
  func.func @_pool_kernel(%arg0: memref<10x16xf32, #tpu.memory_space<vmem>>, %arg1: memref<3x16xf32, #tpu.memory_space<vmem>>, %arg2: memref<3x1xf32, #tpu.memory_space<vmem>>, %arg3: memref<10x1xf32, #tpu.memory_space<vmem>>, %arg4: memref<6xi32, #tpu.memory_space<smem>>, %arg5: memref<1x128xf32, #tpu.memory_space<vmem>>) attributes {dimension_semantics = [], scalar_prefetch = 0 : i64, scratch_operands = 0 : i64, tpu.core_type = #tpu.core_type<tc>} {
    %c0 = arith.constant 0 : index
    %c0_0 = arith.constant 0 : index
    %0 = vector.load %arg2[%c0, %c0_0] : memref<3x1xf32, #tpu.memory_space<vmem>>, vector<3x1xf32>
    %cst = arith.constant dense<0xFF800000> : vector<1xf32>
    %1 = vector.multi_reduction <maximumf>, %0, %cst [0] : vector<3x1xf32> to vector<1xf32>
    %2 = vector.shape_cast %1 : vector<1xf32> to vector<1x1xf32>
    %3 = vector.broadcast %2 : vector<1x1xf32> to vector<3x1xf32>
    %4 = arith.subf %0, %3 : vector<3x1xf32>
    %5 = math.exp %4 : vector<3x1xf32>
    %cst_1 = arith.constant dense<0.000000e+00> : vector<1xf32>
    %6 = vector.multi_reduction <add>, %5, %cst_1 [0] : vector<3x1xf32> to vector<1xf32>
    %7 = vector.shape_cast %6 : vector<1xf32> to vector<1x1xf32>
    %8 = vector.broadcast %7 : vector<1x1xf32> to vector<3x1xf32>
    %9 = arith.divf %5, %8 : vector<3x1xf32>
    %c0_2 = arith.constant 0 : index
    %c0_3 = arith.constant 0 : index
    %10 = vector.load %arg1[%c0_2, %c0_3] : memref<3x16xf32, #tpu.memory_space<vmem>>, vector<3x16xf32>
    %11 = vector.broadcast %9 : vector<3x1xf32> to vector<3x16xf32>
    %12 = arith.mulf %11, %10 : vector<3x16xf32>
    %cst_4 = arith.constant dense<0.000000e+00> : vector<16xf32>
    %13 = vector.multi_reduction <add>, %12, %cst_4 [0] : vector<3x16xf32> to vector<16xf32>
    %14 = vector.shape_cast %13 : vector<16xf32> to vector<1x16xf32>
    %c0_5 = arith.constant 0 : index
    %c0_6 = arith.constant 0 : index
    %15 = vector.load %arg3[%c0_5, %c0_6] : memref<10x1xf32, #tpu.memory_space<vmem>>, vector<10x1xf32>
    %c0_7 = arith.constant 0 : index
    %c0_8 = arith.constant 0 : index
    %16 = vector.load %arg0[%c0_7, %c0_8] : memref<10x16xf32, #tpu.memory_space<vmem>>, vector<10x16xf32>
    %17 = tpu.iota {dimensions = array<i32: 0>} : vector<10x1xi32>
    %c0_9 = arith.constant 0 : index
    %18 = memref.load %arg4[%c0_9] : memref<6xi32, #tpu.memory_space<smem>>
    %c1 = arith.constant 1 : index
    %19 = memref.load %arg4[%c1] : memref<6xi32, #tpu.memory_space<smem>>
    %20 = vector.broadcast %18 : i32 to vector<10x1xi32>
    %21 = arith.cmpi sge, %17, %20 : vector<10x1xi32>
    %22 = vector.broadcast %19 : i32 to vector<10x1xi32>
    %23 = arith.cmpi slt, %17, %22 : vector<10x1xi32>
    %24 = arith.andi %21, %23 : vector<10x1xi1>
    %cst_10 = arith.constant -1.000000e+30 : f32
    %25 = vector.broadcast %cst_10 : f32 to vector<10x1xf32>
    %26 = arith.select %24, %15, %25 : vector<10x1xi1>, vector<10x1xf32>
    %cst_11 = arith.constant dense<0xFF800000> : vector<1xf32>
    %27 = vector.multi_reduction <maximumf>, %26, %cst_11 [0] : vector<10x1xf32> to vector<1xf32>
    %28 = vector.shape_cast %27 : vector<1xf32> to vector<1x1xf32>
    %29 = vector.broadcast %28 : vector<1x1xf32> to vector<10x1xf32>
    %30 = arith.subf %26, %29 : vector<10x1xf32>
    %31 = math.exp %30 : vector<10x1xf32>
    %cst_12 = arith.constant 0.000000e+00 : f32
    %32 = vector.broadcast %cst_12 : f32 to vector<10x1xf32>
    %33 = arith.select %24, %31, %32 : vector<10x1xi1>, vector<10x1xf32>
    %cst_13 = arith.constant dense<0.000000e+00> : vector<1xf32>
    %34 = vector.multi_reduction <add>, %33, %cst_13 [0] : vector<10x1xf32> to vector<1xf32>
    %35 = vector.shape_cast %34 : vector<1xf32> to vector<1x1xf32>
    %36 = vector.broadcast %35 : vector<1x1xf32> to vector<10x1xf32>
    %37 = arith.divf %33, %36 : vector<10x1xf32>
    %38 = vector.broadcast %18 : i32 to vector<10x1xi32>
    %39 = arith.cmpi eq, %17, %38 : vector<10x1xi32>
    %40 = arith.extui %39 : vector<10x1xi1> to vector<10x1xi32>
    %41 = arith.sitofp %40 : vector<10x1xi32> to vector<10x1xf32>
    %42 = arith.cmpi sge, %18, %19 : i32
    %43 = arith.select %42, %41, %37 : vector<10x1xf32>
    %44 = vector.broadcast %43 : vector<10x1xf32> to vector<10x16xf32>
    %45 = arith.mulf %44, %16 : vector<10x16xf32>
    %cst_14 = arith.constant dense<0.000000e+00> : vector<16xf32>
    %46 = vector.multi_reduction <add>, %45, %cst_14 [0] : vector<10x16xf32> to vector<16xf32>
    %47 = vector.shape_cast %46 : vector<16xf32> to vector<1x16xf32>
    %c2 = arith.constant 2 : index
    %48 = memref.load %arg4[%c2] : memref<6xi32, #tpu.memory_space<smem>>
    %c3 = arith.constant 3 : index
    %49 = memref.load %arg4[%c3] : memref<6xi32, #tpu.memory_space<smem>>
    %50 = vector.broadcast %48 : i32 to vector<10x1xi32>
    %51 = arith.cmpi sge, %17, %50 : vector<10x1xi32>
    %52 = vector.broadcast %49 : i32 to vector<10x1xi32>
    %53 = arith.cmpi slt, %17, %52 : vector<10x1xi32>
    %54 = arith.andi %51, %53 : vector<10x1xi1>
    %cst_15 = arith.constant -1.000000e+30 : f32
    %55 = vector.broadcast %cst_15 : f32 to vector<10x1xf32>
    %56 = arith.select %54, %15, %55 : vector<10x1xi1>, vector<10x1xf32>
    %cst_16 = arith.constant dense<0xFF800000> : vector<1xf32>
    %57 = vector.multi_reduction <maximumf>, %56, %cst_16 [0] : vector<10x1xf32> to vector<1xf32>
    %58 = vector.shape_cast %57 : vector<1xf32> to vector<1x1xf32>
    %59 = vector.broadcast %58 : vector<1x1xf32> to vector<10x1xf32>
    %60 = arith.subf %56, %59 : vector<10x1xf32>
    %61 = math.exp %60 : vector<10x1xf32>
    %cst_17 = arith.constant 0.000000e+00 : f32
    %62 = vector.broadcast %cst_17 : f32 to vector<10x1xf32>
    %63 = arith.select %54, %61, %62 : vector<10x1xi1>, vector<10x1xf32>
    %cst_18 = arith.constant dense<0.000000e+00> : vector<1xf32>
    %64 = vector.multi_reduction <add>, %63, %cst_18 [0] : vector<10x1xf32> to vector<1xf32>
    %65 = vector.shape_cast %64 : vector<1xf32> to vector<1x1xf32>
    %66 = vector.broadcast %65 : vector<1x1xf32> to vector<10x1xf32>
    %67 = arith.divf %63, %66 : vector<10x1xf32>
    %68 = vector.broadcast %48 : i32 to vector<10x1xi32>
    %69 = arith.cmpi eq, %17, %68 : vector<10x1xi32>
    %70 = arith.extui %69 : vector<10x1xi1> to vector<10x1xi32>
    %71 = arith.sitofp %70 : vector<10x1xi32> to vector<10x1xf32>
    %72 = arith.cmpi sge, %48, %49 : i32
    %73 = arith.select %72, %71, %67 : vector<10x1xf32>
    %74 = vector.broadcast %73 : vector<10x1xf32> to vector<10x16xf32>
    %75 = arith.mulf %74, %16 : vector<10x16xf32>
    %cst_19 = arith.constant dense<0.000000e+00> : vector<16xf32>
    %76 = vector.multi_reduction <add>, %75, %cst_19 [0] : vector<10x16xf32> to vector<16xf32>
    %77 = vector.shape_cast %76 : vector<16xf32> to vector<1x16xf32>
    %c4 = arith.constant 4 : index
    %78 = memref.load %arg4[%c4] : memref<6xi32, #tpu.memory_space<smem>>
    %c5 = arith.constant 5 : index
    %79 = memref.load %arg4[%c5] : memref<6xi32, #tpu.memory_space<smem>>
    %80 = vector.broadcast %78 : i32 to vector<10x1xi32>
    %81 = arith.cmpi sge, %17, %80 : vector<10x1xi32>
    %82 = vector.broadcast %79 : i32 to vector<10x1xi32>
    %83 = arith.cmpi slt, %17, %82 : vector<10x1xi32>
    %84 = arith.andi %81, %83 : vector<10x1xi1>
    %cst_20 = arith.constant -1.000000e+30 : f32
    %85 = vector.broadcast %cst_20 : f32 to vector<10x1xf32>
    %86 = arith.select %84, %15, %85 : vector<10x1xi1>, vector<10x1xf32>
    %cst_21 = arith.constant dense<0xFF800000> : vector<1xf32>
    %87 = vector.multi_reduction <maximumf>, %86, %cst_21 [0] : vector<10x1xf32> to vector<1xf32>
    %88 = vector.shape_cast %87 : vector<1xf32> to vector<1x1xf32>
    %89 = vector.broadcast %88 : vector<1x1xf32> to vector<10x1xf32>
    %90 = arith.subf %86, %89 : vector<10x1xf32>
    %91 = math.exp %90 : vector<10x1xf32>
    %cst_22 = arith.constant 0.000000e+00 : f32
    %92 = vector.broadcast %cst_22 : f32 to vector<10x1xf32>
    %93 = arith.select %84, %91, %92 : vector<10x1xi1>, vector<10x1xf32>
    %cst_23 = arith.constant dense<0.000000e+00> : vector<1xf32>
    %94 = vector.multi_reduction <add>, %93, %cst_23 [0] : vector<10x1xf32> to vector<1xf32>
    %95 = vector.shape_cast %94 : vector<1xf32> to vector<1x1xf32>
    %96 = vector.broadcast %95 : vector<1x1xf32> to vector<10x1xf32>
    %97 = arith.divf %93, %96 : vector<10x1xf32>
    %98 = vector.broadcast %78 : i32 to vector<10x1xi32>
    %99 = arith.cmpi eq, %17, %98 : vector<10x1xi32>
    %100 = arith.extui %99 : vector<10x1xi1> to vector<10x1xi32>
    %101 = arith.sitofp %100 : vector<10x1xi32> to vector<10x1xf32>
    %102 = arith.cmpi sge, %78, %79 : i32
    %103 = arith.select %102, %101, %97 : vector<10x1xf32>
    %104 = vector.broadcast %103 : vector<10x1xf32> to vector<10x16xf32>
    %105 = arith.mulf %104, %16 : vector<10x16xf32>
    %cst_24 = arith.constant dense<0.000000e+00> : vector<16xf32>
    %106 = vector.multi_reduction <add>, %105, %cst_24 [0] : vector<10x16xf32> to vector<16xf32>
    %107 = vector.shape_cast %106 : vector<16xf32> to vector<1x16xf32>
    %108 = tpu.concatenate %47, %77, %107 in 0 : vector<1x16xf32>, vector<1x16xf32>, vector<1x16xf32> -> vector<3x16xf32>
    %109 = vector.broadcast %9 : vector<3x1xf32> to vector<3x16xf32>
    %110 = arith.mulf %109, %108 : vector<3x16xf32>
    %cst_25 = arith.constant dense<0.000000e+00> : vector<16xf32>
    %111 = vector.multi_reduction <add>, %110, %cst_25 [0] : vector<3x16xf32> to vector<16xf32>
    %112 = vector.shape_cast %111 : vector<16xf32> to vector<1x16xf32>
    %cst_26 = arith.constant 0.000000e+00 : f32
    %113 = vector.broadcast %cst_26 : f32 to vector<1x96xf32>
    %114 = tpu.concatenate %112, %14, %113 in 1 : vector<1x16xf32>, vector<1x16xf32>, vector<1x96xf32> -> vector<1x128xf32>
    %c0_27 = arith.constant 0 : index
    %c0_28 = arith.constant 0 : index
    %115 = vector.load %arg5[%c0_27, %c0_28] : memref<1x128xf32, #tpu.memory_space<vmem>>, vector<1x128xf32>
    tpu.vector_store %arg5[%c0_27, %c0_28], %114 {strides = array<i32>} : memref<1x128xf32, #tpu.memory_space<vmem>>, vector<1x128xf32>,
    return
  }
}

module attributes {stable_mosaic.version = 11 : i64} {
  func.func @_mlp_kernel(%arg0: memref<18x32xf32, #tpu.memory_space<vmem>>, %arg1: memref<32x32xf32, #tpu.memory_space<vmem>>, %arg2: memref<1x32xf32, #tpu.memory_space<vmem>>, %arg3: memref<32x16xf32, #tpu.memory_space<vmem>>, %arg4: memref<1x16xf32, #tpu.memory_space<vmem>>, %arg5: memref<18x16xf32, #tpu.memory_space<vmem>>) attributes {dimension_semantics = [], scalar_prefetch = 0 : i64, scratch_operands = 0 : i64, tpu.core_type = #tpu.core_type<tc>} {
    %c0 = arith.constant 0 : index
    %c0_0 = arith.constant 0 : index
    %0 = vector.load %arg0[%c0, %c0_0] : memref<18x32xf32, #tpu.memory_space<vmem>>, vector<18x32xf32>
    %c0_1 = arith.constant 0 : index
    %c0_2 = arith.constant 0 : index
    %1 = vector.load %arg1[%c0_1, %c0_2] : memref<32x32xf32, #tpu.memory_space<vmem>>, vector<32x32xf32>
    %cst = arith.constant dense<0.000000e+00> : vector<18x32xf32>
    %2 = tpu.matmul %0, %1, %cst {dimension_numbers = #tpu.dot_dimension_numbers<[1], [0], [0], [1], [0, 0, 1, 1], [], []>} : vector<18x32xf32>, vector<32x32xf32>, vector<18x32xf32> -> vector<18x32xf32>
    %c0_3 = arith.constant 0 : index
    %c0_4 = arith.constant 0 : index
    %3 = vector.load %arg2[%c0_3, %c0_4] : memref<1x32xf32, #tpu.memory_space<vmem>>, vector<1x32xf32>
    %4 = vector.broadcast %3 : vector<1x32xf32> to vector<18x32xf32>
    %5 = arith.addf %2, %4 : vector<18x32xf32>
    %cst_5 = arith.constant 0.000000e+00 : f32
    %6 = vector.broadcast %cst_5 : f32 to vector<18x32xf32>
    %7 = arith.maximumf %5, %6 : vector<18x32xf32>
    %c0_6 = arith.constant 0 : index
    %c0_7 = arith.constant 0 : index
    %8 = vector.load %arg3[%c0_6, %c0_7] : memref<32x16xf32, #tpu.memory_space<vmem>>, vector<32x16xf32>
    %cst_8 = arith.constant dense<0.000000e+00> : vector<18x16xf32>
    %9 = tpu.matmul %7, %8, %cst_8 {dimension_numbers = #tpu.dot_dimension_numbers<[1], [0], [0], [1], [0, 0, 1, 1], [], []>} : vector<18x32xf32>, vector<32x16xf32>, vector<18x16xf32> -> vector<18x16xf32>
    %c0_9 = arith.constant 0 : index
    %c0_10 = arith.constant 0 : index
    %10 = vector.load %arg4[%c0_9, %c0_10] : memref<1x16xf32, #tpu.memory_space<vmem>>, vector<1x16xf32>
    %11 = vector.broadcast %10 : vector<1x16xf32> to vector<18x16xf32>
    %12 = arith.addf %9, %11 : vector<18x16xf32>
    %c0_11 = arith.constant 0 : index
    %c0_12 = arith.constant 0 : index
    %13 = vector.load %arg5[%c0_11, %c0_12] : memref<18x16xf32, #tpu.memory_space<vmem>>, vector<18x16xf32>
    tpu.vector_store %arg5[%c0_11, %c0_12], %12 {strides = array<i32>} : memref<18x16xf32, #tpu.memory_space<vmem>>, vector<18x16xf32>,
    return
  }
}

module attributes {stable_mosaic.version = 11 : i64} {
  func.func @_step_kernel(%arg0: i32, %arg1: memref<1x4x16xf32, #tpu.memory_space<vmem>>, %arg2: memref<1x4x16xf32, #tpu.memory_space<vmem>>, %arg3: memref<1x16xf32, #tpu.memory_space<vmem>>, %arg4: memref<1x128xf32, #tpu.memory_space<vmem>>, %arg5: memref<1x32xf32, #tpu.memory_space<vmem>>, %arg6: memref<64x64xf32, #tpu.memory_space<vmem>>, %arg7: memref<1x64xf32, #tpu.memory_space<vmem>>, %arg8: memref<64x32xf32, #tpu.memory_space<vmem>>, %arg9: memref<1x32xf32, #tpu.memory_space<vmem>>, %arg10: memref<64x256xf32, #tpu.memory_space<vmem>>, %arg11: memref<1x256xf32, #tpu.memory_space<vmem>>, %arg12: memref<256x1xf32, #tpu.memory_space<vmem>>, %arg13: memref<1x1xf32, #tpu.memory_space<vmem>>, %arg14: memref<1x4x1xf32, #tpu.memory_space<vmem>>, %arg15: memref<1x32xf32, #tpu.memory_space<vmem>>) attributes {dimension_semantics = [#tpu.dimension_semantics<arbitrary>], iteration_bounds = array<i64: 2>, scalar_prefetch = 0 : i64, scratch_operands = 1 : i64, tpu.core_type = #tpu.core_type<tc>, window_params = [{transform_indices = @transform_0, window_bounds = array<i64: 1, 4, 16>}, {transform_indices = @transform_1, window_bounds = array<i64: 1, 4, 16>}, {pipeline_mode = #tpu.pipeline_mode<synchronous>, transform_indices = @transform_2, window_bounds = array<i64: 1, 16>}, {pipeline_mode = #tpu.pipeline_mode<synchronous>, transform_indices = @transform_3, window_bounds = array<i64: 1, 128>}, {pipeline_mode = #tpu.pipeline_mode<synchronous>, transform_indices = @transform_4, window_bounds = array<i64: 1, 32>}, {pipeline_mode = #tpu.pipeline_mode<synchronous>, transform_indices = @transform_5, window_bounds = array<i64: 64, 64>}, {pipeline_mode = #tpu.pipeline_mode<synchronous>, transform_indices = @transform_6, window_bounds = array<i64: 1, 64>}, {pipeline_mode = #tpu.pipeline_mode<synchronous>, transform_indices = @transform_7, window_bounds = array<i64: 64, 32>}, {pipeline_mode = #tpu.pipeline_mode<synchronous>, transform_indices = @transform_8, window_bounds = array<i64: 1, 32>}, {pipeline_mode = #tpu.pipeline_mode<synchronous>, transform_indices = @transform_9, window_bounds = array<i64: 64, 256>}, {pipeline_mode = #tpu.pipeline_mode<synchronous>, transform_indices = @transform_10, window_bounds = array<i64: 1, 256>}, {pipeline_mode = #tpu.pipeline_mode<synchronous>, transform_indices = @transform_11, window_bounds = array<i64: 256, 1>}, {pipeline_mode = #tpu.pipeline_mode<synchronous>, transform_indices = @transform_12, window_bounds = array<i64: 1, 1>}, {transform_indices = @transform_13, window_bounds = array<i64: 1, 4, 1>}]} {
    %c0_i32 = arith.constant 0 : i32
    %0 = arith.cmpi eq, %arg0, %c0_i32 : i32
    %1 = arith.extui %0 : i1 to i32
    %c0_i32_0 = arith.constant 0 : i32
    %2 = arith.cmpi ne, %1, %c0_i32_0 : i32
    scf.if %2 {
      %c0_42 = arith.constant 0 : index
      %c0_43 = arith.constant 0 : index
      %67 = vector.load %arg5[%c0_42, %c0_43] : memref<1x32xf32, #tpu.memory_space<vmem>>, vector<1x32xf32>
      %c0_44 = arith.constant 0 : index
      %c0_45 = arith.constant 0 : index
      %68 = vector.load %arg15[%c0_44, %c0_45] : memref<1x32xf32, #tpu.memory_space<vmem>>, vector<1x32xf32>
      tpu.vector_store %arg15[%c0_44, %c0_45], %67 {strides = array<i32>} : memref<1x32xf32, #tpu.memory_space<vmem>>, vector<1x32xf32>,
    } else {
    }
    %c0 = arith.constant 0 : index
    %c0_1 = arith.constant 0 : index
    %c0_2 = arith.constant 0 : index
    %3 = vector.load %arg1[%c0, %c0_1, %c0_2] : memref<1x4x16xf32, #tpu.memory_space<vmem>>, vector<1x4x16xf32>
    %4 = vector.shape_cast %3 : vector<1x4x16xf32> to vector<4x16xf32>
    %c0_3 = arith.constant 0 : index
    %c0_4 = arith.constant 0 : index
    %c0_5 = arith.constant 0 : index
    %5 = vector.load %arg2[%c0_3, %c0_4, %c0_5] : memref<1x4x16xf32, #tpu.memory_space<vmem>>, vector<1x4x16xf32>
    %6 = vector.shape_cast %5 : vector<1x4x16xf32> to vector<4x16xf32>
    %c0_6 = arith.constant 0 : index
    %c0_7 = arith.constant 0 : index
    %7 = vector.load %arg3[%c0_6, %c0_7] : memref<1x16xf32, #tpu.memory_space<vmem>>, vector<1x16xf32>
    %8 = vector.broadcast %7 : vector<1x16xf32> to vector<4x16xf32>
    %9 = arith.addf %8, %4 : vector<4x16xf32>
    %c0_8 = arith.constant 0 : index
    %c0_9 = arith.constant 0 : index
    %10 = vector.load %arg4[%c0_8, %c0_9] : memref<1x128xf32, #tpu.memory_space<vmem>>, vector<1x128xf32>
    %11 = vector.extract_strided_slice %10 {offsets = [0, 0], sizes = [1, 16], strides = [1, 1]} : vector<1x128xf32> to vector<1x16xf32>
    %12 = vector.extract_strided_slice %10 {offsets = [0, 16], sizes = [1, 16], strides = [1, 1]} : vector<1x128xf32> to vector<1x16xf32>
    %13 = vector.shape_cast %11 : vector<1x16xf32> to vector<1x16xf32>
    %14 = vector.broadcast %13 : vector<1x16xf32> to vector<4x16xf32>
    %15 = vector.shape_cast %12 : vector<1x16xf32> to vector<1x16xf32>
    %16 = vector.broadcast %15 : vector<1x16xf32> to vector<4x16xf32>
    %17 = tpu.concatenate %14, %16, %9, %6 in 1 : vector<4x16xf32>, vector<4x16xf32>, vector<4x16xf32>, vector<4x16xf32> -> vector<4x64xf32>
    %c0_10 = arith.constant 0 : index
    %c0_11 = arith.constant 0 : index
    %18 = vector.load %arg6[%c0_10, %c0_11] : memref<64x64xf32, #tpu.memory_space<vmem>>, vector<64x64xf32>
    %cst = arith.constant dense<0.000000e+00> : vector<4x64xf32>
    %19 = tpu.matmul %17, %18, %cst {dimension_numbers = #tpu.dot_dimension_numbers<[1], [0], [0], [1], [0, 0, 1, 1], [], []>} : vector<4x64xf32>, vector<64x64xf32>, vector<4x64xf32> -> vector<4x64xf32>
    %c0_12 = arith.constant 0 : index
    %c0_13 = arith.constant 0 : index
    %20 = vector.load %arg7[%c0_12, %c0_13] : memref<1x64xf32, #tpu.memory_space<vmem>>, vector<1x64xf32>
    %21 = vector.broadcast %20 : vector<1x64xf32> to vector<4x64xf32>
    %22 = arith.addf %19, %21 : vector<4x64xf32>
    %cst_14 = arith.constant 0.000000e+00 : f32
    %23 = vector.broadcast %cst_14 : f32 to vector<4x64xf32>
    %24 = arith.maximumf %22, %23 : vector<4x64xf32>
    %c0_15 = arith.constant 0 : index
    %c0_16 = arith.constant 0 : index
    %25 = vector.load %arg8[%c0_15, %c0_16] : memref<64x32xf32, #tpu.memory_space<vmem>>, vector<64x32xf32>
    %cst_17 = arith.constant dense<0.000000e+00> : vector<4x32xf32>
    %26 = tpu.matmul %24, %25, %cst_17 {dimension_numbers = #tpu.dot_dimension_numbers<[1], [0], [0], [1], [0, 0, 1, 1], [], []>} : vector<4x64xf32>, vector<64x32xf32>, vector<4x32xf32> -> vector<4x32xf32>
    %c0_18 = arith.constant 0 : index
    %c0_19 = arith.constant 0 : index
    %27 = vector.load %arg9[%c0_18, %c0_19] : memref<1x32xf32, #tpu.memory_space<vmem>>, vector<1x32xf32>
    %28 = vector.broadcast %27 : vector<1x32xf32> to vector<4x32xf32>
    %29 = arith.addf %26, %28 : vector<4x32xf32>
    %c0_20 = arith.constant 0 : index
    %c0_21 = arith.constant 0 : index
    %30 = vector.load %arg15[%c0_20, %c0_21] : memref<1x32xf32, #tpu.memory_space<vmem>>, vector<1x32xf32>
    %31 = vector.shape_cast %30 : vector<1x32xf32> to vector<1x32xf32>
    %32 = vector.broadcast %31 : vector<1x32xf32> to vector<4x32xf32>
    %33 = tpu.concatenate %29, %32 in 1 : vector<4x32xf32>, vector<4x32xf32> -> vector<4x64xf32>
    %c0_22 = arith.constant 0 : index
    %c0_23 = arith.constant 0 : index
    %34 = vector.load %arg10[%c0_22, %c0_23] : memref<64x256xf32, #tpu.memory_space<vmem>>, vector<64x256xf32>
    %cst_24 = arith.constant dense<0.000000e+00> : vector<4x256xf32>
    %35 = tpu.matmul %33, %34, %cst_24 {dimension_numbers = #tpu.dot_dimension_numbers<[1], [0], [0], [1], [0, 0, 1, 1], [], []>} : vector<4x64xf32>, vector<64x256xf32>, vector<4x256xf32> -> vector<4x256xf32>
    %c0_25 = arith.constant 0 : index
    %c0_26 = arith.constant 0 : index
    %36 = vector.load %arg11[%c0_25, %c0_26] : memref<1x256xf32, #tpu.memory_space<vmem>>, vector<1x256xf32>
    %37 = vector.broadcast %36 : vector<1x256xf32> to vector<4x256xf32>
    %38 = arith.addf %35, %37 : vector<4x256xf32>
    %cst_27 = arith.constant 0.000000e+00 : f32
    %39 = vector.broadcast %cst_27 : f32 to vector<4x256xf32>
    %40 = arith.maximumf %38, %39 : vector<4x256xf32>
    %c0_28 = arith.constant 0 : index
    %c0_29 = arith.constant 0 : index
    %41 = vector.load %arg12[%c0_28, %c0_29] : memref<256x1xf32, #tpu.memory_space<vmem>>, vector<256x1xf32>
    %cst_30 = arith.constant dense<0.000000e+00> : vector<4x1xf32>
    %42 = tpu.matmul %40, %41, %cst_30 {dimension_numbers = #tpu.dot_dimension_numbers<[1], [0], [0], [1], [0, 0, 1, 1], [], []>} : vector<4x256xf32>, vector<256x1xf32>, vector<4x1xf32> -> vector<4x1xf32>
    %c0_31 = arith.constant 0 : index
    %c0_32 = arith.constant 0 : index
    %43 = vector.load %arg13[%c0_31, %c0_32] : memref<1x1xf32, #tpu.memory_space<vmem>>, vector<1x1xf32>
    %44 = vector.broadcast %43 : vector<1x1xf32> to vector<4x1xf32>
    %45 = arith.addf %42, %44 : vector<4x1xf32>
    %46 = vector.shape_cast %45 : vector<4x1xf32> to vector<1x4x1xf32>
    %c0_33 = arith.constant 0 : index
    %c0_34 = arith.constant 0 : index
    %c0_35 = arith.constant 0 : index
    %47 = vector.load %arg14[%c0_33, %c0_34, %c0_35] : memref<1x4x1xf32, #tpu.memory_space<vmem>>, vector<1x4x1xf32>
    tpu.vector_store %arg14[%c0_33, %c0_34, %c0_35], %46 {strides = array<i32>} : memref<1x4x1xf32, #tpu.memory_space<vmem>>, vector<1x4x1xf32>,
    %48 = tpu.iota {dimensions = array<i32: 0>} : vector<4x1xi32>
    %49 = arith.sitofp %48 : vector<4x1xi32> to vector<4x1xf32>
    %cst_36 = arith.constant dense<0xFF800000> : vector<1xf32>
    %50 = vector.multi_reduction <maximumf>, %45, %cst_36 [0] : vector<4x1xf32> to vector<1xf32>
    %51 = vector.shape_cast %50 : vector<1xf32> to vector<1x1xf32>
    %52 = vector.broadcast %51 : vector<1x1xf32> to vector<4x1xf32>
    %53 = arith.cmpf oge, %45, %52 : vector<4x1xf32>
    %cst_37 = arith.constant 4.000000e+00 : f32
    %54 = vector.broadcast %cst_37 : f32 to vector<4x1xf32>
    %55 = arith.select %53, %49, %54 : vector<4x1xi1>, vector<4x1xf32>
    %cst_38 = arith.constant dense<0x7F800000> : vector<1xf32>
    %56 = vector.multi_reduction <minimumf>, %55, %cst_38 [0] : vector<4x1xf32> to vector<1xf32>
    %57 = vector.shape_cast %56 : vector<1xf32> to vector<1x1xf32>
    %58 = vector.broadcast %57 : vector<1x1xf32> to vector<4x1xf32>
    %59 = arith.cmpf oeq, %49, %58 : vector<4x1xf32>
    %60 = arith.extui %59 : vector<4x1xi1> to vector<4x1xi32>
    %61 = arith.sitofp %60 : vector<4x1xi32> to vector<4x1xf32>
    %62 = vector.broadcast %61 : vector<4x1xf32> to vector<4x32xf32>
    %63 = arith.mulf %62, %29 : vector<4x32xf32>
    %cst_39 = arith.constant dense<0.000000e+00> : vector<32xf32>
    %64 = vector.multi_reduction <add>, %63, %cst_39 [0] : vector<4x32xf32> to vector<32xf32>
    %65 = vector.shape_cast %64 : vector<32xf32> to vector<1x32xf32>
    %c0_40 = arith.constant 0 : index
    %c0_41 = arith.constant 0 : index
    %66 = vector.load %arg15[%c0_40, %c0_41] : memref<1x32xf32, #tpu.memory_space<vmem>>, vector<1x32xf32>
    tpu.vector_store %arg15[%c0_40, %c0_41], %65 {strides = array<i32>} : memref<1x32xf32, #tpu.memory_space<vmem>>, vector<1x32xf32>,
    return
  }
  func.func @transform_0(%arg0: i32) -> (i32, i32, i32) {
    %c0_i32 = arith.constant 0 : i32
    %c0_i32_0 = arith.constant 0 : i32
    %c0_i32_1 = arith.constant 0 : i32
    return %arg0, %c0_i32, %c0_i32_0 : i32, i32, i32
  }
  func.func @transform_1(%arg0: i32) -> (i32, i32, i32) {
    %c0_i32 = arith.constant 0 : i32
    %c0_i32_0 = arith.constant 0 : i32
    %c0_i32_1 = arith.constant 0 : i32
    return %arg0, %c0_i32, %c0_i32_0 : i32, i32, i32
  }
  func.func @transform_2(%arg0: i32) -> (i32, i32) {
    %c0_i32 = arith.constant 0 : i32
    %c0_i32_0 = arith.constant 0 : i32
    %c0_i32_1 = arith.constant 0 : i32
    return %c0_i32, %c0_i32_0 : i32, i32
  }
  func.func @transform_3(%arg0: i32) -> (i32, i32) {
    %c0_i32 = arith.constant 0 : i32
    %c0_i32_0 = arith.constant 0 : i32
    %c0_i32_1 = arith.constant 0 : i32
    return %c0_i32, %c0_i32_0 : i32, i32
  }
  func.func @transform_4(%arg0: i32) -> (i32, i32) {
    %c0_i32 = arith.constant 0 : i32
    %c0_i32_0 = arith.constant 0 : i32
    %c0_i32_1 = arith.constant 0 : i32
    return %c0_i32, %c0_i32_0 : i32, i32
  }
  func.func @transform_5(%arg0: i32) -> (i32, i32) {
    %c0_i32 = arith.constant 0 : i32
    %c0_i32_0 = arith.constant 0 : i32
    %c0_i32_1 = arith.constant 0 : i32
    return %c0_i32, %c0_i32_0 : i32, i32
  }
  func.func @transform_6(%arg0: i32) -> (i32, i32) {
    %c0_i32 = arith.constant 0 : i32
    %c0_i32_0 = arith.constant 0 : i32
    %c0_i32_1 = arith.constant 0 : i32
    return %c0_i32, %c0_i32_0 : i32, i32
  }
  func.func @transform_7(%arg0: i32) -> (i32, i32) {
    %c0_i32 = arith.constant 0 : i32
    %c0_i32_0 = arith.constant 0 : i32
    %c0_i32_1 = arith.constant 0 : i32
    return %c0_i32, %c0_i32_0 : i32, i32
  }
  func.func @transform_8(%arg0: i32) -> (i32, i32) {
    %c0_i32 = arith.constant 0 : i32
    %c0_i32_0 = arith.constant 0 : i32
    %c0_i32_1 = arith.constant 0 : i32
    return %c0_i32, %c0_i32_0 : i32, i32
  }
  func.func @transform_9(%arg0: i32) -> (i32, i32) {
    %c0_i32 = arith.constant 0 : i32
    %c0_i32_0 = arith.constant 0 : i32
    %c0_i32_1 = arith.constant 0 : i32
    return %c0_i32, %c0_i32_0 : i32, i32
  }
  func.func @transform_10(%arg0: i32) -> (i32, i32) {
    %c0_i32 = arith.constant 0 : i32
    %c0_i32_0 = arith.constant 0 : i32
    %c0_i32_1 = arith.constant 0 : i32
    return %c0_i32, %c0_i32_0 : i32, i32
  }
  func.func @transform_11(%arg0: i32) -> (i32, i32) {
    %c0_i32 = arith.constant 0 : i32
    %c0_i32_0 = arith.constant 0 : i32
    %c0_i32_1 = arith.constant 0 : i32
    return %c0_i32, %c0_i32_0 : i32, i32
  }
  func.func @transform_12(%arg0: i32) -> (i32, i32) {
    %c0_i32 = arith.constant 0 : i32
    %c0_i32_0 = arith.constant 0 : i32
    %c0_i32_1 = arith.constant 0 : i32
    return %c0_i32, %c0_i32_0 : i32, i32
  }
  func.func @transform_13(%arg0: i32) -> (i32, i32, i32) {
    %c0_i32 = arith.constant 0 : i32
    %c0_i32_0 = arith.constant 0 : i32
    %c0_i32_1 = arith.constant 0 : i32
    return %arg0, %c0_i32, %c0_i32_0 : i32, i32, i32
  }
}

</mosaic_0001>

<llo_original>
// kernel: forward_element.5
$region0: #{forward_element.5}
  #allocation0 [shape = 'u32[]', space=smem, size = 0x4, offset = 0x4, fixed_abs, tag = 'smem constant byte address 0x4 - core index']
  #allocation1 [shape = 'u32[144,128]{1,0:T(1,128)}', space=vmem, size = 0x12000, scoped, tag = 'internal scratch']
  %s0 = inlined_call_operand.vmem [shape: f32[18,32], index: 0, kind: input, shape index: {}]
  %s1 = inlined_call_operand.vmem [shape: f32[32,32], index: 1, kind: input, shape index: {}]
  %s2 = inlined_call_operand.vmem [shape: f32[1,32], index: 2, kind: input, shape index: {}]
  %s3 = inlined_call_operand.vmem [shape: f32[32,16], index: 3, kind: input, shape index: {}]
  %s4 = inlined_call_operand.vmem [shape: f32[1,16], index: 4, kind: input, shape index: {}]
  %s5 = inlined_call_operand.vmem [shape: f32[18,16], index: 5, kind: output, shape index: {}]
  %s6 = sld [smem:[#allocation0]]
  $region30: #{forward_element.5} parent=0
    _
  %s8 = ssub.s32 1, %s6
  %s9 = scalar_select 0, %s8, %s6
  // Predicated region
  $region2: #{forward_element.5} parent=0 // pred_check
    _
  $region3: #{forward_element.5} parent=0 // pred_check_branch
    %11 = sbr.rel (0) target = $region5
  $region4: #{forward_element.5} parent=0 // pred_region
    _
  $region5: #{forward_element.5} parent=0 // pred_fallthru
    _
  // Predicated region
  $region6: #{forward_element.5} parent=0 // pred_check
    _
  $region7: #{forward_element.5} parent=0 // pred_check_branch
    %13 = sbr.rel (0) target = $region9
  $region8: #{forward_element.5} parent=0 // pred_region
    _
  $region9: #{forward_element.5} parent=0 // pred_fallthru
    _
  // Predicated region
  $region10: #{forward_element.5} parent=0 // pred_check
    _
  $region11: #{forward_element.5} parent=0 // pred_check_branch
    %15 = sbr.rel (0) target = $region13
  $region12: #{forward_element.5} parent=0 // pred_region
    _
  $region13: #{forward_element.5} parent=0 // pred_fallthru
    _
  // Predicated region
  $region14: #{forward_element.5} parent=0 // pred_check
    _
  $region15: #{forward_element.5} parent=0 // pred_check_branch
    %17 = sbr.rel (0) target = $region17
  $region16: #{forward_element.5} parent=0 // pred_region
    _
  $region17: #{forward_element.5} parent=0 // pred_fallthru
    _
  // Predicated region
  $region18: #{forward_element.5} parent=0 // pred_check
    _
  $region19: #{forward_element.5} parent=0 // pred_check_branch
    %19 = sbr.rel (0) target = $region21
  $region20: #{forward_element.5} parent=0 // pred_region
    _
  $region21: #{forward_element.5} parent=0 // pred_fallthru
    _
  %v20 = vld [vmem:[%s0] sm:$0xff]
  %v21 = vld [vmem:[%s0 + $0x8] sm:$0xff]
  %v22 = vld [vmem:[%s0 + $0x10] sm:$0x3]
  %v23 = vld [vmem:[%s1] sm:$0xff]
  %v24 = vld [vmem:[%s1 + $0x8] sm:$0xff]
  %v25 = vld [vmem:[%s1 + $0x10] sm:$0xff]
  %v26 = vld [vmem:[%s1 + $0x18] sm:$0xff]
  %v27 = vld [vmem:[%s2] sm:$0x1]
  %v29 = vlaneseq
  %v30 = vshrl.u32 %v29, 7
  %v31 = vsub.s32 0, %v30
  %v32 = vrot.slane %v27, %v31
  %vm34 = vcmask 261120
  %v36 = vsel %vm34, %v20, 0
  %v39 = vsel %vm34, %v21, 0
  %v42 = vsel %vm34, %v22, 0
  %44 = vmatprep.subr.mxu0 0.0
  %45 = vmatpush1.msra.mxu0 %v23
  %46 = vmatprep.subr.mxu0 0.0
  %47 = vmatpush1.msra.mxu0 %v24
  %48 = vmatprep.subr.mxu0 0.0
  %49 = vmatpush1.msra.mxu0 %v25
  %50 = vmatprep.subr.mxu0 0.0
  %51 = vmatpush1.msra.mxu0 %v26
  %52 = vmatprep.subr.mxu0 0.0
  %53 = vmatpush1.msra.mxu0 0.0
  %54 = vmatprep.subr.mxu0 0.0
  %55 = vmatpush1.msra.mxu0 0.0
  %56 = vmatprep.subr.mxu0 0.0
  %57 = vmatpush1.msra.mxu0 0.0
  %58 = vmatprep.subr.mxu0 0.0
  %59 = vmatpush1.msra.mxu0 0.0
  %60 = vmatprep.subr.mxu0 0.0
  %61 = vmatpush1.msra.mxu0 0.0
  %62 = vmatprep.subr.mxu0 0.0
  %63 = vmatpush1.msra.mxu0 0.0
  %64 = vmatprep.subr.mxu0 0.0
  %65 = vmatpush1.msra.mxu0 0.0
  %66 = vmatprep.subr.mxu0 0.0
  %67 = vmatpush1.msra.mxu0 0.0
  %68 = vmatprep.subr.mxu0 0.0
  %69 = vmatpush1.msra.mxu0 0.0
  %70 = vmatprep.subr.mxu0 0.0
  %71 = vmatpush1.msra.mxu0 0.0
  %72 = vmatprep.subr.mxu0 0.0
  %73 = vmatpush1.msra.mxu0 0.0
  %74 = vmatprep.subr.mxu0 0.0
  %75 = vmatpush1.msra.mxu0 0.0
  %76 = vmatprep.subr.mxu0 0.0
  %77 = vmatpush1.msra.mxu0 0.0
  %78 = vmatprep.subr.mxu0 0.0
  %79 = vmatpush1.msra.mxu0 0.0
  %80 = vmatprep.subr.mxu0 0.0
  %81 = vmatpush1.msra.mxu0 0.0
  %82 = vmatprep.subr.mxu0 0.0
  %83 = vmatpush1.msra.mxu0 0.0
  %84 = vmatprep.subr.mxu0 0.0
  %85 = vmatpush1.msra.mxu0 0.0
  %86 = vmatprep.subr.mxu0 0.0
  %87 = vmatpush1.msra.mxu0 0.0
  %88 = vmatprep.subr.mxu0 0.0
  %89 = vmatpush1.msra.mxu0 0.0
  %90 = vmatprep.subr.mxu0 0.0
  %91 = vmatpush1.msra.mxu0 0.0
  %92 = vmatprep.subr.mxu0 0.0
  %93 = vmatpush1.msra.mxu0 0.0
  %94 = vmatprep.subr.mxu0 0.0
  %95 = vmatpush1.msra.mxu0 0.0
  %96 = vmatprep.subr.mxu0 0.0
  %97 = vmatpush1.msra.mxu0 0.0
  %98 = vmatprep.subr.mxu0 0.0
  %99 = vmatpush1.msra.mxu0 0.0
  %100 = vmatprep.subr.mxu0 0.0
  %101 = vmatpush1.msra.mxu0 0.0
  %102 = vmatprep.subr.mxu0 0.0
  %103 = vmatpush1.msra.mxu0 0.0
  %104 = vmatprep.subr.mxu0 0.0
  %105 = vmatpush1.msra.mxu0 0.0
  %106 = vmatprep.subr.mxu0 0.0
  %107 = vmatpush1.msra.mxu0 0.0
  %108 = vmatprep.mubr.f32.mxu0 0.0
  %109 = vmatmul.mubr.f32.gmra.mrb[0].mxu0 %v36
  %v110 = vpop.f32.mrb[0].mxu0
  %v111 = vadd.f32 %v32, %v110
  %v112 = vpop.f32.mrb[0].mxu0
  %113 = vmatprep.mubr.f32.mxu0 0.0
  %114 = vmatmul.mubr.f32.gmra.mrb[0].mxu0 %v39
  %v115 = vpop.f32.mrb[0].mxu0
  %v116 = vadd.f32 %v32, %v115
  %v117 = vpop.f32.mrb[0].mxu0
  %118 = vmatprep.mubr.f32.mxu0 0.0
  %119 = vmatmul.mubr.f32.gmra.mrb[0].mxu0 %v42
  %v120 = vpop.f32.mrb[0].mxu0
  %v121 = vadd.f32 %v32, %v120
  %v122 = vpop.f32.mrb[0].mxu0
  %123 = vdwg.mxu0
  %v124 = vmax.f32 %v111, 0.0
  %v125 = vmax.f32 %v116, 0.0
  %v126 = vmax.f32 %v121, 0.0
  %v127 = vld [vmem:[%s3] sm:$0xff]
  %v128 = vld [vmem:[%s3 + $0x8] sm:$0xff]
  %v129 = vld [vmem:[%s3 + $0x10] sm:$0xff]
  %v130 = vld [vmem:[%s3 + $0x18] sm:$0xff]
  %v131 = vld [vmem:[%s4] sm:$0x1]
  %v133 = vlaneseq
  %v134 = vshrl.u32 %v133, 7
  %v135 = vsub.s32 0, %v134
  %v136 = vrot.slane %v131, %v135
  %v139 = vsel %vm34, %v124, 0
  %v142 = vsel %vm34, %v125, 0
  %v145 = vsel %vm34, %v126, 0
  %147 = vmatprep.subr.mxu0 0.0
  %148 = vmatpush1.msra.mxu0 %v127
  %149 = vmatprep.subr.mxu0 0.0
  %150 = vmatpush1.msra.mxu0 %v128
  %151 = vmatprep.subr.mxu0 0.0
  %152 = vmatpush1.msra.mxu0 %v129
  %153 = vmatprep.subr.mxu0 0.0
  %154 = vmatpush1.msra.mxu0 %v130
  %155 = vmatprep.subr.mxu0 0.0
  %156 = vmatpush1.msra.mxu0 0.0
  %157 = vmatprep.subr.mxu0 0.0
  %158 = vmatpush1.msra.mxu0 0.0
  %159 = vmatprep.subr.mxu0 0.0
  %160 = vmatpush1.msra.mxu0 0.0
  %161 = vmatprep.subr.mxu0 0.0
  %162 = vmatpush1.msra.mxu0 0.0
  %163 = vmatprep.subr.mxu0 0.0
  %164 = vmatpush1.msra.mxu0 0.0
  %165 = vmatprep.subr.mxu0 0.0
  %166 = vmatpush1.msra.mxu0 0.0
  %167 = vmatprep.subr.mxu0 0.0
  %168 = vmatpush1.msra.mxu0 0.0
  %169 = vmatprep.subr.mxu0 0.0
  %170 = vmatpush1.msra.mxu0 0.0
  %171 = vmatprep.subr.mxu0 0.0
  %172 = vmatpush1.msra.mxu0 0.0
  %173 = vmatprep.subr.mxu0 0.0
  %174 = vmatpush1.msra.mxu0 0.0
  %175 = vmatprep.subr.mxu0 0.0
  %176 = vmatpush1.msra.mxu0 0.0
  %177 = vmatprep.subr.mxu0 0.0
  %178 = vmatpush1.msra.mxu0 0.0
  %179 = vmatprep.subr.mxu0 0.0
  %180 = vmatpush1.msra.mxu0 0.0
  %181 = vmatprep.subr.mxu0 0.0
  %182 = vmatpush1.msra.mxu0 0.0
  %183 = vmatprep.subr.mxu0 0.0
  %184 = vmatpush1.msra.mxu0 0.0
  %185 = vmatprep.subr.mxu0 0.0
  %186 = vmatpush1.msra.mxu0 0.0
  %187 = vmatprep.subr.mxu0 0.0
  %188 = vmatpush1.msra.mxu0 0.0
  %189 = vmatprep.subr.mxu0 0.0
  %190 = vmatpush1.msra.mxu0 0.0
  %191 = vmatprep.subr.mxu0 0.0
  %192 = vmatpush1.msra.mxu0 0.0
  %193 = vmatprep.subr.mxu0 0.0
  %194 = vmatpush1.msra.mxu0 0.0
  %195 = vmatprep.subr.mxu0 0.0
  %196 = vmatpush1.msra.mxu0 0.0
  %197 = vmatprep.subr.mxu0 0.0
  %198 = vmatpush1.msra.mxu0 0.0
  %199 = vmatprep.subr.mxu0 0.0
  %200 = vmatpush1.msra.mxu0 0.0
  %201 = vmatprep.subr.mxu0 0.0
  %202 = vmatpush1.msra.mxu0 0.0
  %203 = vmatprep.subr.mxu0 0.0
  %204 = vmatpush1.msra.mxu0 0.0
  %205 = vmatprep.subr.mxu0 0.0
  %206 = vmatpush1.msra.mxu0 0.0
  %207 = vmatprep.subr.mxu0 0.0
  %208 = vmatpush1.msra.mxu0 0.0
  %209 = vmatprep.subr.mxu0 0.0
  %210 = vmatpush1.msra.mxu0 0.0
  %211 = vmatprep.mubr.f32.mxu0 0.0
  %212 = vmatmul.mubr.f32.gmra.mrb[0].mxu0 %v139
  %v213 = vpop.f32.mrb[0].mxu0
  %v214 = vadd.f32 %v136, %v213
  %v215 = vpop.f32.mrb[0].mxu0
  %216 = vmatprep.mubr.f32.mxu0 0.0
  %217 = vmatmul.mubr.f32.gmra.mrb[0].mxu0 %v142
  %v218 = vpop.f32.mrb[0].mxu0
  %v219 = vadd.f32 %v136, %v218
  %v220 = vpop.f32.mrb[0].mxu0
  %221 = vmatprep.mubr.f32.mxu0 0.0
  %222 = vmatmul.mubr.f32.gmra.mrb[0].mxu0 %v145
  %v223 = vpop.f32.mrb[0].mxu0
  %v224 = vadd.f32 %v136, %v223
  %v225 = vpop.f32.mrb[0].mxu0
  %226 = vdwg.mxu0
  %vm227 = vcmask 130048
  %228 = vst.msk [vmem:[%s5] sm:$0xff] %vm227, %v214
  %229 = vst.msk [vmem:[%s5 + $0x8] sm:$0xff] %vm227, %v219
  %vm230 = vcmask 123904
  %231 = vst.msk [vmem:[%s5 + $0x10] sm:$0x3] %vm230, %v224
  // Predicated region
  $region22: #{forward_element.5} parent=0 // pred_check
    _
  $region23: #{forward_element.5} parent=0 // pred_check_branch
    %233 = sbr.rel (0) target = $region25
  $region24: #{forward_element.5} parent=0 // pred_region
    _
  $region25: #{forward_element.5} parent=0 // pred_fallthru
    _
  // Predicated region
  $region26: #{forward_element.5} parent=0 // pred_check
    _
  $region27: #{forward_element.5} parent=0 // pred_check_branch
    %235 = sbr.rel (0) target = $region29
  $region28: #{forward_element.5} parent=0 // pred_region
    _
  $region29: #{forward_element.5} parent=0 // pred_fallthru
    _

// kernel: forward_element.4
$region0: #{forward_element.4}
  #allocation0 [shape = 'u32[]', space=smem, size = 0x4, offset = 0x4, fixed_abs, tag = 'smem constant byte address 0x4 - core index']
  #allocation1 [shape = 'u32[144,128]{1,0:T(1,128)}', space=vmem, size = 0x12000, scoped, tag = 'internal scratch']
  %s0 = inlined_call_operand.vmem [shape: f32[12,24], index: 0, kind: input, shape index: {}]
  %s1 = inlined_call_operand.vmem [shape: f32[24,24], index: 1, kind: input, shape index: {}]
  %s2 = inlined_call_operand.vmem [shape: f32[1,24], index: 2, kind: input, shape index: {}]
  %s3 = inlined_call_operand.vmem [shape: f32[24,16], index: 3, kind: input, shape index: {}]
  %s4 = inlined_call_operand.vmem [shape: f32[1,16], index: 4, kind: input, shape index: {}]
  %s5 = inlined_call_operand.vmem [shape: f32[12,16], index: 5, kind: output, shape index: {}]
  %s6 = sld [smem:[#allocation0]]
  $region30: #{forward_element.4} parent=0
    _
  %s8 = ssub.s32 1, %s6
  %s9 = scalar_select 0, %s8, %s6
  // Predicated region
  $region2: #{forward_element.4} parent=0 // pred_check
    _
  $region3: #{forward_element.4} parent=0 // pred_check_branch
    %11 = sbr.rel (0) target = $region5
  $region4: #{forward_element.4} parent=0 // pred_region
    _
  $region5: #{forward_element.4} parent=0 // pred_fallthru
    _
  // Predicated region
  $region6: #{forward_element.4} parent=0 // pred_check
    _
  $region7: #{forward_element.4} parent=0 // pred_check_branch
    %13 = sbr.rel (0) target = $region9
  $region8: #{forward_element.4} parent=0 // pred_region
    _
  $region9: #{forward_element.4} parent=0 // pred_fallthru
    _
  // Predicated region
  $region10: #{forward_element.4} parent=0 // pred_check
    _
  $region11: #{forward_element.4} parent=0 // pred_check_branch
    %15 = sbr.rel (0) target = $region13
  $region12: #{forward_element.4} parent=0 // pred_region
    _
  $region13: #{forward_element.4} parent=0 // pred_fallthru
    _
  // Predicated region
  $region14: #{forward_element.4} parent=0 // pred_check
    _
  $region15: #{forward_element.4} parent=0 // pred_check_branch
    %17 = sbr.rel (0) target = $region17
  $region16: #{forward_element.4} parent=0 // pred_region
    _
  $region17: #{forward_element.4} parent=0 // pred_fallthru
    _
  // Predicated region
  $region18: #{forward_element.4} parent=0 // pred_check
    _
  $region19: #{forward_element.4} parent=0 // pred_check_branch
    %19 = sbr.rel (0) target = $region21
  $region20: #{forward_element.4} parent=0 // pred_region
    _
  $region21: #{forward_element.4} parent=0 // pred_fallthru
    _
  %v20 = vld [vmem:[%s0] sm:$0xff]
  %v21 = vld [vmem:[%s0 + $0x8] sm:$0xf]
  %v22 = vld [vmem:[%s1] sm:$0xff]
  %v23 = vld [vmem:[%s1 + $0x8] sm:$0xff]
  %v24 = vld [vmem:[%s1 + $0x10] sm:$0xff]
  %v25 = vld [vmem:[%s2] sm:$0x1]
  %v27 = vlaneseq
  %v28 = vshrl.u32 %v27, 7
  %v29 = vsub.s32 0, %v28
  %v30 = vrot.slane %v25, %v29
  %vm32 = vcmask 195584
  %v34 = vsel %vm32, %v20, 0
  %v37 = vsel %vm32, %v21, 0
  %39 = vmatprep.subr.mxu0 0.0
  %40 = vmatpush1.msra.mxu0 %v22
  %41 = vmatprep.subr.mxu0 0.0
  %42 = vmatpush1.msra.mxu0 %v23
  %43 = vmatprep.subr.mxu0 0.0
  %44 = vmatpush1.msra.mxu0 %v24
  %45 = vmatprep.subr.mxu0 0.0
  %46 = vmatpush1.msra.mxu0 0.0
  %47 = vmatprep.subr.mxu0 0.0
  %48 = vmatpush1.msra.mxu0 0.0
  %49 = vmatprep.subr.mxu0 0.0
  %50 = vmatpush1.msra.mxu0 0.0
  %51 = vmatprep.subr.mxu0 0.0
  %52 = vmatpush1.msra.mxu0 0.0
  %53 = vmatprep.subr.mxu0 0.0
  %54 = vmatpush1.msra.mxu0 0.0
  %55 = vmatprep.subr.mxu0 0.0
  %56 = vmatpush1.msra.mxu0 0.0
  %57 = vmatprep.subr.mxu0 0.0
  %58 = vmatpush1.msra.mxu0 0.0
  %59 = vmatprep.subr.mxu0 0.0
  %60 = vmatpush1.msra.mxu0 0.0
  %61 = vmatprep.subr.mxu0 0.0
  %62 = vmatpush1.msra.mxu0 0.0
  %63 = vmatprep.subr.mxu0 0.0
  %64 = vmatpush1.msra.mxu0 0.0
  %65 = vmatprep.subr.mxu0 0.0
  %66 = vmatpush1.msra.mxu0 0.0
  %67 = vmatprep.subr.mxu0 0.0
  %68 = vmatpush1.msra.mxu0 0.0
  %69 = vmatprep.subr.mxu0 0.0
  %70 = vmatpush1.msra.mxu0 0.0
  %71 = vmatprep.subr.mxu0 0.0
  %72 = vmatpush1.msra.mxu0 0.0
  %73 = vmatprep.subr.mxu0 0.0
  %74 = vmatpush1.msra.mxu0 0.0
  %75 = vmatprep.subr.mxu0 0.0
  %76 = vmatpush1.msra.mxu0 0.0
  %77 = vmatprep.subr.mxu0 0.0
  %78 = vmatpush1.msra.mxu0 0.0
  %79 = vmatprep.subr.mxu0 0.0
  %80 = vmatpush1.msra.mxu0 0.0
  %81 = vmatprep.subr.mxu0 0.0
  %82 = vmatpush1.msra.mxu0 0.0
  %83 = vmatprep.subr.mxu0 0.0
  %84 = vmatpush1.msra.mxu0 0.0
  %85 = vmatprep.subr.mxu0 0.0
  %86 = vmatpush1.msra.mxu0 0.0
  %87 = vmatprep.subr.mxu0 0.0
  %88 = vmatpush1.msra.mxu0 0.0
  %89 = vmatprep.subr.mxu0 0.0
  %90 = vmatpush1.msra.mxu0 0.0
  %91 = vmatprep.subr.mxu0 0.0
  %92 = vmatpush1.msra.mxu0 0.0
  %93 = vmatprep.subr.mxu0 0.0
  %94 = vmatpush1.msra.mxu0 0.0
  %95 = vmatprep.subr.mxu0 0.0
  %96 = vmatpush1.msra.mxu0 0.0
  %97 = vmatprep.subr.mxu0 0.0
  %98 = vmatpush1.msra.mxu0 0.0
  %99 = vmatprep.subr.mxu0 0.0
  %100 = vmatpush1.msra.mxu0 0.0
  %101 = vmatprep.subr.mxu0 0.0
  %102 = vmatpush1.msra.mxu0 0.0
  %103 = vmatprep.mubr.f32.mxu0 0.0
  %104 = vmatmul.mubr.f32.gmra.mrb[0].mxu0 %v34
  %v105 = vpop.f32.mrb[0].mxu0
  %v106 = vadd.f32 %v30, %v105
  %v107 = vpop.f32.mrb[0].mxu0
  %108 = vmatprep.mubr.f32.mxu0 0.0
  %109 = vmatmul.mubr.f32.gmra.mrb[0].mxu0 %v37
  %v110 = vpop.f32.mrb[0].mxu0
  %v111 = vadd.f32 %v30, %v110
  %v112 = vpop.f32.mrb[0].mxu0
  %113 = vdwg.mxu0
  %v114 = vmax.f32 %v106, 0.0
  %v115 = vmax.f32 %v111, 0.0
  %v116 = vld [vmem:[%s3] sm:$0xff]
  %v117 = vld [vmem:[%s3 + $0x8] sm:$0xff]
  %v118 = vld [vmem:[%s3 + $0x10] sm:$0xff]
  %v119 = vld [vmem:[%s4] sm:$0x1]
  %v121 = vlaneseq
  %v122 = vshrl.u32 %v121, 7
  %v123 = vsub.s32 0, %v122
  %v124 = vrot.slane %v119, %v123
  %v127 = vsel %vm32, %v114, 0
  %v130 = vsel %vm32, %v115, 0
  %132 = vmatprep.subr.mxu0 0.0
  %133 = vmatpush1.msra.mxu0 %v116
  %134 = vmatprep.subr.mxu0 0.0
  %135 = vmatpush1.msra.mxu0 %v117
  %136 = vmatprep.subr.mxu0 0.0
  %137 = vmatpush1.msra.mxu0 %v118
  %138 = vmatprep.subr.mxu0 0.0
  %139 = vmatpush1.msra.mxu0 0.0
  %140 = vmatprep.subr.mxu0 0.0
  %141 = vmatpush1.msra.mxu0 0.0
  %142 = vmatprep.subr.mxu0 0.0
  %143 = vmatpush1.msra.mxu0 0.0
  %144 = vmatprep.subr.mxu0 0.0
  %145 = vmatpush1.msra.mxu0 0.0
  %146 = vmatprep.subr.mxu0 0.0
  %147 = vmatpush1.msra.mxu0 0.0
  %148 = vmatprep.subr.mxu0 0.0
  %149 = vmatpush1.msra.mxu0 0.0
  %150 = vmatprep.subr.mxu0 0.0
  %151 = vmatpush1.msra.mxu0 0.0
  %152 = vmatprep.subr.mxu0 0.0
  %153 = vmatpush1.msra.mxu0 0.0
  %154 = vmatprep.subr.mxu0 0.0
  %155 = vmatpush1.msra.mxu0 0.0
  %156 = vmatprep.subr.mxu0 0.0
  %157 = vmatpush1.msra.mxu0 0.0
  %158 = vmatprep.subr.mxu0 0.0
  %159 = vmatpush1.msra.mxu0 0.0
  %160 = vmatprep.subr.mxu0 0.0
  %161 = vmatpush1.msra.mxu0 0.0
  %162 = vmatprep.subr.mxu0 0.0
  %163 = vmatpush1.msra.mxu0 0.0
  %164 = vmatprep.subr.mxu0 0.0
  %165 = vmatpush1.msra.mxu0 0.0
  %166 = vmatprep.subr.mxu0 0.0
  %167 = vmatpush1.msra.mxu0 0.0
  %168 = vmatprep.subr.mxu0 0.0
  %169 = vmatpush1.msra.mxu0 0.0
  %170 = vmatprep.subr.mxu0 0.0
  %171 = vmatpush1.msra.mxu0 0.0
  %172 = vmatprep.subr.mxu0 0.0
  %173 = vmatpush1.msra.mxu0 0.0
  %174 = vmatprep.subr.mxu0 0.0
  %175 = vmatpush1.msra.mxu0 0.0
  %176 = vmatprep.subr.mxu0 0.0
  %177 = vmatpush1.msra.mxu0 0.0
  %178 = vmatprep.subr.mxu0 0.0
  %179 = vmatpush1.msra.mxu0 0.0
  %180 = vmatprep.subr.mxu0 0.0
  %181 = vmatpush1.msra.mxu0 0.0
  %182 = vmatprep.subr.mxu0 0.0
  %183 = vmatpush1.msra.mxu0 0.0
  %184 = vmatprep.subr.mxu0 0.0
  %185 = vmatpush1.msra.mxu0 0.0
  %186 = vmatprep.subr.mxu0 0.0
  %187 = vmatpush1.msra.mxu0 0.0
  %188 = vmatprep.subr.mxu0 0.0
  %189 = vmatpush1.msra.mxu0 0.0
  %190 = vmatprep.subr.mxu0 0.0
  %191 = vmatpush1.msra.mxu0 0.0
  %192 = vmatprep.subr.mxu0 0.0
  %193 = vmatpush1.msra.mxu0 0.0
  %194 = vmatprep.subr.mxu0 0.0
  %195 = vmatpush1.msra.mxu0 0.0
  %196 = vmatprep.mubr.f32.mxu0 0.0
  %197 = vmatmul.mubr.f32.gmra.mrb[0].mxu0 %v127
  %v198 = vpop.f32.mrb[0].mxu0
  %v199 = vadd.f32 %v124, %v198
  %v200 = vpop.f32.mrb[0].mxu0
  %201 = vmatprep.mubr.f32.mxu0 0.0
  %202 = vmatmul.mubr.f32.gmra.mrb[0].mxu0 %v130
  %v203 = vpop.f32.mrb[0].mxu0
  %v204 = vadd.f32 %v124, %v203
  %v205 = vpop.f32.mrb[0].mxu0
  %206 = vdwg.mxu0
  %vm207 = vcmask 130048
  %208 = vst.msk [vmem:[%s5] sm:$0xff] %vm207, %v199
  %vm209 = vcmask 125952
  %210 = vst.msk [vmem:[%s5 + $0x8] sm:$0xf] %vm209, %v204
  // Predicated region
  $region22: #{forward_element.4} parent=0 // pred_check
    _
  $region23: #{forward_element.4} parent=0 // pred_check_branch
    %212 = sbr.rel (0) target = $region25
  $region24: #{forward_element.4} parent=0 // pred_region
    _
  $region25: #{forward_element.4} parent=0 // pred_fallthru
    _
  // Predicated region
  $region26: #{forward_element.4} parent=0 // pred_check
    _
  $region27: #{forward_element.4} parent=0 // pred_check_branch
    %214 = sbr.rel (0) target = $region29
  $region28: #{forward_element.4} parent=0 // pred_region
    _
  $region29: #{forward_element.4} parent=0 // pred_fallthru
    _

// kernel: forward_element.6
$region0: #{forward_element.6}
  #allocation0 [shape = 'u32[]', space=smem, size = 0x4, offset = 0x4, fixed_abs, tag = 'smem constant byte address 0x4 - core index']
  #allocation1 [shape = 'u32[144,128]{1,0:T(1,128)}', space=vmem, size = 0x12000, scoped, tag = 'internal scratch']
  %s0 = inlined_call_operand.vmem [shape: f32[10,16], index: 0, kind: input, shape index: {}]
  %s1 = inlined_call_operand.vmem [shape: f32[3,16], index: 1, kind: input, shape index: {}]
  %s2 = inlined_call_operand.vmem [shape: f32[3,1], index: 2, kind: input, shape index: {}]
  %s3 = inlined_call_operand.vmem [shape: f32[10,1], index: 3, kind: input, shape index: {}]
  %s4 = inlined_call_operand.vmem [shape: s32[6], index: 4, kind: input, shape index: {}]
  %s5 = inlined_call_operand.vmem [shape: f32[1,128], index: 5, kind: output, shape index: {}]
  %s6 = sld [smem:[#allocation0]]
  $region34: #{forward_element.6} parent=0
    _
  %s8 = ssub.s32 1, %s6
  %s9 = scalar_select 0, %s8, %s6
  $region1: #{forward_element.6} parent=0
    #allocation2 [shape = 'u8[512]{0}', space=smem, size = 0x200, scoped, tag = 'input window, operand 4, single buffered']
    #allocation3 [shape = 's32[1]{0}', space=sflag, size = 0x4, scoped, tag = 'scoped memory for forward_element.6']
    %10 = vsyncpa [#allocation3], 0
    // Predicated region
    $region2: #{forward_element.6} parent=1 // pred_check
      _
    $region3: #{forward_element.6} parent=1 // pred_check_branch
      %12 = sbr.rel (0) target = $region5
    $region4: #{forward_element.6} parent=1 // pred_region
      _
    $region5: #{forward_element.6} parent=1 // pred_fallthru
      _
    // Predicated region
    $region6: #{forward_element.6} parent=1 // pred_check
      _
    $region7: #{forward_element.6} parent=1 // pred_check_branch
      %14 = sbr.rel (0) target = $region9
    $region8: #{forward_element.6} parent=1 // pred_region
      _
    $region9: #{forward_element.6} parent=1 // pred_fallthru
      _
    // Predicated region
    $region10: #{forward_element.6} parent=1 // pred_check
      _
    $region11: #{forward_element.6} parent=1 // pred_check_branch
      %16 = sbr.rel (0) target = $region13
    $region12: #{forward_element.6} parent=1 // pred_region
      _
    $region13: #{forward_element.6} parent=1 // pred_fallthru
      _
    // Predicated region
    $region14: #{forward_element.6} parent=1 // pred_check
      _
    $region15: #{forward_element.6} parent=1 // pred_check_branch
      %18 = sbr.rel (0) target = $region17
    $region16: #{forward_element.6} parent=1 // pred_region
      _
    $region17: #{forward_element.6} parent=1 // pred_fallthru
      _
    // Predicated region
    $region18: #{forward_element.6} parent=1 // pred_check
      _
    $region19: #{forward_element.6} parent=1 // pred_check_branch
      %20 = sbr.rel (0) target = $region21
    $region20: #{forward_element.6} parent=1 // pred_region
      %s22 = ssub.s32 16, 16
      %23 = vsyncadd [#allocation3], %s22
      %s25 = sshll.u32 %s4, 4
      %s26 = int_to_ptr.vmem [resolvable:$true] %s25
      %28 = dma.vmem_to_smem %s26, 16, [#allocation2], [#allocation3]
    $region21: #{forward_element.6} parent=1 // pred_fallthru
      _
    // Predicated region
    $region22: #{forward_element.6} parent=1 // pred_check
      _
    $region23: #{forward_element.6} parent=1 // pred_check_branch
      %30 = sbr.rel (0) target = $region25
    $region24: #{forward_element.6} parent=1 // pred_region
      %31 = dma.done [#allocation3], 16
    $region25: #{forward_element.6} parent=1 // pred_fallthru
      _
    %32 = sfence
    %v33 = vld [vmem:[%s2] sm:$0x7]
    %vm34 = vcmask 2048
    %v35 = vsel %vm34, %v33, -inf
    %v36 = vrot.slane %v35, 4
    %v37 = vmax.f32 %v35, %v36
    %v38 = vrot.slane %v37, 2
    %v39 = vmax.f32 %v37, %v38
    %v40 = vrot.slane %v39, 1
    %v41 = vmax.f32 %v39, %v40
    %v42 = vsub.f32 %v33, %v41
    %v43 = vmul.f32 %v42, 1.442695
    %v44 = vpow.pop %v43
    %v45 = vsel %vm34, %v44, 0.0
    %v46 = vrot.slane %v45, 4
    %v47 = vadd.f32 %v45, %v46
    %v48 = vrot.slane %v47, 2
    %v49 = vadd.f32 %v47, %v48
    %v50 = vrot.slane %v49, 1
    %v51 = vadd.f32 %v49, %v50
    %v52 = vrcp.pop %v51
    %v53 = vmul.f32 %v44, %v52
    %v54 = vld [vmem:[%s1] sm:$0x7]
    %56 = vset.pattern.permute.xlu0 0
    %57 = vperm.xlu0 %56, %v53
    %v58 = vpop.permute.xlu0 %57
    %v60 = vmul.f32 %v58, %v54
    %vm61 = vcmask 124928
    %v62 = vsel %vm61, %v60, 0.0
    %v63 = vrot.slane %v62, 4
    %v64 = vadd.f32 %v62, %v63
    %v65 = vrot.slane %v64, 2
    %v66 = vadd.f32 %v64, %v65
    %v67 = vrot.slane %v66, 1
    %v68 = vadd.f32 %v66, %v67
    %v69 = vld [vmem:[%s3] sm:$0xff]
    %v70 = vld [vmem:[%s3 + $0x8] sm:$0x3]
    %v71 = vld [vmem:[%s0] sm:$0xff]
    %v72 = vld [vmem:[%s0 + $0x8] sm:$0x3]
    %v73 = vlaneseq
    %v74 = vshrl.u32 %v73, 7
    %v75 = vadd.s32 %v74, 8
    %s76 = sld [smem:[#allocation2]]
    %s77 = sld [smem:[#allocation2 + $0x1]]
    %v78 = vstv %s76
    %vm79 = vcmp.ge.s32.totalorder %v74, %v78
    %vm80 = vcmp.ge.s32.totalorder %v75, %v78
    %v81 = vstv %s77
    %vm82 = vcmp.lt.s32.totalorder %v74, %v81
    %vm83 = vcmp.lt.s32.totalorder %v75, %v81
    %vm84 = vmand %vm79, %vm82
    %vm85 = vmand %vm80, %vm83
    %v86 = vsel %vm84, %v69, -1e+30
    %v87 = vsel %vm85, %v70, -1e+30
    %vm88 = vcmask 7168
    %v89 = vsel %vm88, %v86, -inf
    %vm90 = vcmask 1024
    %v91 = vsel %vm90, %v87, -inf
    %v92 = vmax.f32 %v89, %v91
    %v93 = vrot.slane %v92, 4
    %v94 = vmax.f32 %v92, %v93
    %v95 = vrot.slane %v94, 2
    %v96 = vmax.f32 %v94, %v95
    %v97 = vrot.slane %v96, 1
    %v98 = vmax.f32 %v96, %v97
    %v99 = vsub.f32 %v86, %v98
    %v100 = vsub.f32 %v87, %v98
    %v101 = vmul.f32 %v99, 1.442695
    %v102 = vpow.pop %v101
    %v103 = vmul.f32 %v100, 1.442695
    %v104 = vpow.pop %v103
    %v105 = vsel %vm84, %v102, 0.0
    %v106 = vsel %vm85, %v104, 0.0
    %v107 = vsel %vm88, %v105, 0.0
    %v108 = vsel %vm90, %v106, 0.0
    %v109 = vadd.f32 %v107, %v108
    %v110 = vrot.slane %v109, 4
    %v111 = vadd.f32 %v109, %v110
    %v112 = vrot.slane %v111, 2
    %v113 = vadd.f32 %v111, %v112
    %v114 = vrot.slane %v113, 1
    %v115 = vadd.f32 %v113, %v114
    %v116 = vrcp.pop %v115
    %v117 = vmul.f32 %v105, %v116
    %v118 = vmul.f32 %v106, %v116
    %vm119 = vcmp.eq.s32.totalorder %v74, %v78
    %vm120 = vcmp.eq.s32.totalorder %v75, %v78
    %v121 = vsel %vm119, 1, 0
    %v122 = vsel %vm120, 1, 0
    %v123 = vcvt.s32.f32 %v121
    %v124 = vcvt.s32.f32 %v122
    %p125 = scmp.ge.s32.totalorder %s76, %s77
    %s126 = scalar_select %p125, 1, 0
    %v127 = vstv %s126
    %vm128 = vcmp.eq.s32.totalorder %v127, 1
    %v129 = vsel %vm128, %v123, %v117
    %v130 = vsel %vm128, %v124, %v118
    %132 = vset.pattern.permute.xlu0 0
    %133 = vperm.xlu0 %132, %v129
    %v134 = vpop.permute.xlu0 %133
    %137 = vset.pattern.permute.xlu0 0
    %138 = vperm.xlu0 %137, %v130
    %v139 = vpop.permute.xlu0 %138
    %v141 = vmul.f32 %v134, %v71
    %v142 = vmul.f32 %v139, %v72
    %vm143 = vcmask 130048
    %v144 = vsel %vm143, %v141, 0.0
    %vm145 = vcmask 123904
    %v146 = vsel %vm145, %v142, 0.0
    %v147 = vadd.f32 %v144, %v146
    %v148 = vrot.slane %v147, 4
    %v149 = vadd.f32 %v147, %v148
    %v150 = vrot.slane %v149, 2
    %v151 = vadd.f32 %v149, %v150
    %v152 = vrot.slane %v151, 1
    %v153 = vadd.f32 %v151, %v152
    %s154 = sld [smem:[#allocation2 + $0x2]]
    %s155 = sld [smem:[#allocation2 + $0x3]]
    %v156 = vstv %s154
    %vm157 = vcmp.ge.s32.totalorder %v74, %v156
    %vm158 = vcmp.ge.s32.totalorder %v75, %v156
    %v159 = vstv %s155
    %vm160 = vcmp.lt.s32.totalorder %v74, %v159
    %vm161 = vcmp.lt.s32.totalorder %v75, %v159
    %vm162 = vmand %vm157, %vm160
    %vm163 = vmand %vm158, %vm161
    %v164 = vsel %vm162, %v69, -1e+30
    %v165 = vsel %vm163, %v70, -1e+30
    %v166 = vsel %vm88, %v164, -inf
    %v167 = vsel %vm90, %v165, -inf
    %v168 = vmax.f32 %v166, %v167
    %v169 = vrot.slane %v168, 4
    %v170 = vmax.f32 %v168, %v169
    %v171 = vrot.slane %v170, 2
    %v172 = vmax.f32 %v170, %v171
    %v173 = vrot.slane %v172, 1
    %v174 = vmax.f32 %v172, %v173
    %v175 = vsub.f32 %v164, %v174
    %v176 = vsub.f32 %v165, %v174
    %v177 = vmul.f32 %v175, 1.442695
    %v178 = vpow.pop %v177
    %v179 = vmul.f32 %v176, 1.442695
    %v180 = vpow.pop %v179
    %v181 = vsel %vm162, %v178, 0.0
    %v182 = vsel %vm163, %v180, 0.0
    %v183 = vsel %vm88, %v181, 0.0
    %v184 = vsel %vm90, %v182, 0.0
    %v185 = vadd.f32 %v183, %v184
    %v186 = vrot.slane %v185, 4
    %v187 = vadd.f32 %v185, %v186
    %v188 = vrot.slane %v187, 2
    %v189 = vadd.f32 %v187, %v188
    %v190 = vrot.slane %v189, 1
    %v191 = vadd.f32 %v189, %v190
    %v192 = vrcp.pop %v191
    %v193 = vmul.f32 %v181, %v192
    %v194 = vmul.f32 %v182, %v192
    %vm195 = vcmp.eq.s32.totalorder %v74, %v156
    %vm196 = vcmp.eq.s32.totalorder %v75, %v156
    %v197 = vsel %vm195, 1, 0
    %v198 = vsel %vm196, 1, 0
    %v199 = vcvt.s32.f32 %v197
    %v200 = vcvt.s32.f32 %v198
    %p201 = scmp.ge.s32.totalorder %s154, %s155
    %s202 = scalar_select %p201, 1, 0
    %v203 = vstv %s202
    %vm204 = vcmp.eq.s32.totalorder %v203, 1
    %v205 = vsel %vm204, %v199, %v193
    %v206 = vsel %vm204, %v200, %v194
    %208 = vset.pattern.permute.xlu0 0
    %209 = vperm.xlu0 %208, %v205
    %v210 = vpop.permute.xlu0 %209
    %213 = vset.pattern.permute.xlu0 0
    %214 = vperm.xlu0 %213, %v206
    %v215 = vpop.permute.xlu0 %214
    %v217 = vmul.f32 %v210, %v71
    %v218 = vmul.f32 %v215, %v72
    %v219 = vsel %vm143, %v217, 0.0
    %v220 = vsel %vm145, %v218, 0.0
    %v221 = vadd.f32 %v219, %v220
    %v222 = vrot.slane %v221, 4
    %v223 = vadd.f32 %v221, %v222
    %v224 = vrot.slane %v223, 2
    %v225 = vadd.f32 %v223, %v224
    %v226 = vrot.slane %v225, 1
    %v227 = vadd.f32 %v225, %v226
    %s228 = sld [smem:[#allocation2 + $0x4]]
    %s229 = sld [smem:[#allocation2 + $0x5]]
    %v230 = vstv %s228
    %vm231 = vcmp.ge.s32.totalorder %v74, %v230
    %vm232 = vcmp.ge.s32.totalorder %v75, %v230
    %v233 = vstv %s229
    %vm234 = vcmp.lt.s32.totalorder %v74, %v233
    %vm235 = vcmp.lt.s32.totalorder %v75, %v233
    %vm236 = vmand %vm231, %vm234
    %vm237 = vmand %vm232, %vm235
    %v238 = vsel %vm236, %v69, -1e+30
    %v239 = vsel %vm237, %v70, -1e+30
    %v240 = vsel %vm88, %v238, -inf
    %v241 = vsel %vm90, %v239, -inf
    %v242 = vmax.f32 %v240, %v241
    %v243 = vrot.slane %v242, 4
    %v244 = vmax.f32 %v242, %v243
    %v245 = vrot.slane %v244, 2
    %v246 = vmax.f32 %v244, %v245
    %v247 = vrot.slane %v246, 1
    %v248 = vmax.f32 %v246, %v247
    %v249 = vsub.f32 %v238, %v248
    %v250 = vsub.f32 %v239, %v248
    %v251 = vmul.f32 %v249, 1.442695
    %v252 = vpow.pop %v251
    %v253 = vmul.f32 %v250, 1.442695
    %v254 = vpow.pop %v253
    %v255 = vsel %vm236, %v252, 0.0
    %v256 = vsel %vm237, %v254, 0.0
    %v257 = vsel %vm88, %v255, 0.0
    %v258 = vsel %vm90, %v256, 0.0
    %v259 = vadd.f32 %v257, %v258
    %v260 = vrot.slane %v259, 4
    %v261 = vadd.f32 %v259, %v260
    %v262 = vrot.slane %v261, 2
    %v263 = vadd.f32 %v261, %v262
    %v264 = vrot.slane %v263, 1
    %v265 = vadd.f32 %v263, %v264
    %v266 = vrcp.pop %v265
    %v267 = vmul.f32 %v255, %v266
    %v268 = vmul.f32 %v256, %v266
    %vm269 = vcmp.eq.s32.totalorder %v74, %v230
    %vm270 = vcmp.eq.s32.totalorder %v75, %v230
    %v271 = vsel %vm269, 1, 0
    %v272 = vsel %vm270, 1, 0
    %v273 = vcvt.s32.f32 %v271
    %v274 = vcvt.s32.f32 %v272
    %p275 = scmp.ge.s32.totalorder %s228, %s229
    %s276 = scalar_select %p275, 1, 0
    %v277 = vstv %s276
    %vm278 = vcmp.eq.s32.totalorder %v277, 1
    %v279 = vsel %vm278, %v273, %v267
    %v280 = vsel %vm278, %v274, %v268
    %282 = vset.pattern.permute.xlu0 0
    %283 = vperm.xlu0 %282, %v279
    %v284 = vpop.permute.xlu0 %283
    %287 = vset.pattern.permute.xlu0 0
    %288 = vperm.xlu0 %287, %v280
    %v289 = vpop.permute.xlu0 %288
    %v291 = vmul.f32 %v284, %v71
    %v292 = vmul.f32 %v289, %v72
    %v293 = vsel %vm143, %v291, 0.0
    %v294 = vsel %vm145, %v292, 0.0
    %v295 = vadd.f32 %v293, %v294
    %v296 = vrot.slane %v295, 4
    %v297 = vadd.f32 %v295, %v296
    %v298 = vrot.slane %v297, 2
    %v299 = vadd.f32 %v297, %v298
    %v300 = vrot.slane %v299, 1
    %v301 = vadd.f32 %v299, %v300
    %vm302 = vcmask 1040384
    %v303 = vsel %vm302, %v153, %v227
    %vm304 = vcmask 1041408
    %v305 = vsel %vm304, %v303, %v301
    %v306 = vmul.f32 %v58, %v305
    %v307 = vsel %vm61, %v306, 0.0
    %v308 = vrot.slane %v307, 4
    %v309 = vadd.f32 %v307, %v308
    %v310 = vrot.slane %v309, 2
    %v311 = vadd.f32 %v309, %v310
    %v312 = vrot.slane %v311, 1
    %v313 = vadd.f32 %v311, %v312
    %315 = vrot.lane.b32.xlu0 %v68, 16
    %v316 = vpop.permute.xlu0 %315
    %v318 = vsel %vm143, %v313, %v316
    %vm319 = vcmask 261120
    %v320 = vsel %vm319, %v318, 0.0
    %321 = vst [vmem:[%s5] sm:$0x1] %v320
    // Predicated region
    $region26: #{forward_element.6} parent=1 // pred_check
      _
    $region27: #{forward_element.6} parent=1 // pred_check_branch
      %323 = sbr.rel (0) target = $region29
    $region28: #{forward_element.6} parent=1 // pred_region
      _
    $region29: #{forward_element.6} parent=1 // pred_fallthru
      _
    // Predicated region
    $region30: #{forward_element.6} parent=1 // pred_check
      _
    $region31: #{forward_element.6} parent=1 // pred_check_branch
      %325 = sbr.rel (0) target = $region33
    $region32: #{forward_element.6} parent=1 // pred_region
      _
    $region33: #{forward_element.6} parent=1 // pred_fallthru
      _
    %326 = vsyncpa [#allocation3], 1

// kernel: forward_element.7
$region0: #{forward_element.7}
  #allocation0 [shape = 'u32[]', space=smem, size = 0x4, offset = 0x4, fixed_abs, tag = 'smem constant byte address 0x4 - core index']
  #allocation1 [shape = 'u32[144,128]{1,0:T(1,128)}', space=vmem, size = 0x12000, scoped, tag = 'internal scratch']
  #allocation2 [shape = 'f32[1,32]{1,0:T(1,128)}', space=vmem, size = 0x200, scoped, tag = 'scratch operand']
  #allocation3 [shape = 'f32[1,1]{1,0:T(1,128)S(1)}', space=vmem, size = 0x200, scoped, tag = 'scoped memory for forward_element.7']
  %s0 = inlined_call_operand.vmem [shape: f32[2,4,16], index: 0, kind: input, shape index: {}]
  %s1 = inlined_call_operand.vmem [shape: f32[2,4,16], index: 1, kind: input, shape index: {}]
  %s2 = inlined_call_operand.vmem [shape: f32[1,16], index: 2, kind: input, shape index: {}]
  %s3 = inlined_call_operand.vmem [shape: f32[1,128], index: 3, kind: input, shape index: {}]
  %s4 = inlined_call_operand.vmem [shape: f32[1,32], index: 4, kind: input, shape index: {}]
  %s5 = inlined_call_operand.vmem [shape: f32[64,64], index: 5, kind: input, shape index: {}]
  %s6 = inlined_call_operand.vmem [shape: f32[1,64], index: 6, kind: input, shape index: {}]
  %s7 = inlined_call_operand.vmem [shape: f32[64,32], index: 7, kind: input, shape index: {}]
  %s8 = inlined_call_operand.vmem [shape: f32[1,32], index: 8, kind: input, shape index: {}]
  %s9 = inlined_call_operand.vmem [shape: f32[64,256], index: 9, kind: input, shape index: {}]
  %s10 = inlined_call_operand.vmem [shape: f32[1,256], index: 10, kind: input, shape index: {}]
  %s11 = inlined_call_operand.vmem [shape: f32[256,1], index: 11, kind: input, shape index: {}]
  %s12 = inlined_call_operand.<no memory space> [shape: f32[1,1], index: 12, kind: input, shape index: {}]
  %s13 = inlined_call_operand.vmem [shape: f32[2,4,1], index: 13, kind: output, shape index: {}]
  %s14 = sld [smem:[#allocation0]]
  $region89: #{forward_element.7} parent=0
    _
  %s16 = ssub.s32 1, %s14
  %s17 = scalar_select 0, %s16, %s14
  %v18 = vstv %s12
  %19 = vst [vmem:[#allocation3] sm:$0x1] %v18
  loop: start=0, step=1, limit=4
  $region2: #{forward_element.7} parent=0 // loop_pre_header
    _
  $region3: #{forward_element.7} parent=0 // loop_header
    %s21 = sphi 0, %s25
    %p22 = scmp.ge.s32.totalorder %s21, 4
    %s31 = sphi 0, %s33
    %s34 = sphi 0, %s31
    %s35 = sphi 0, %s34
    %s51 = sphi 0, %s35
    %s57 = sphi 0, %s59
    %s60 = sphi 0, %s57
    %s61 = sphi 0, %s60
    %s77 = sphi 0, %s61
    %s81 = sphi 0, %s81
    %s83 = sphi 0, %s81
    %s84 = sphi 0, %s83
    %s98 = sphi 0, %s84
    %s102 = sphi 0, %s102
    %s104 = sphi 0, %s102
    %s105 = sphi 0, %s104
    %s119 = sphi 0, %s105
    %s123 = sphi 0, %s123
    %s125 = sphi 0, %s123
    %s126 = sphi 0, %s125
    %s140 = sphi 0, %s126
    %s144 = sphi 0, %s144
    %s146 = sphi 0, %s144
    %s147 = sphi 0, %s146
    %s161 = sphi 0, %s147
    %s165 = sphi 0, %s165
    %s167 = sphi 0, %s165
    %s168 = sphi 0, %s167
    %s182 = sphi 0, %s168
    %s186 = sphi 0, %s186
    %s188 = sphi 0, %s186
    %s189 = sphi 0, %s188
    %s203 = sphi 0, %s189
    %s207 = sphi 0, %s207
    %s209 = sphi 0, %s207
    %s210 = sphi 0, %s209
    %s224 = sphi 0, %s210
    %s228 = sphi 0, %s228
    %s230 = sphi 0, %s228
    %s231 = sphi 0, %s230
    %s245 = sphi 0, %s231
    %s249 = sphi 0, %s249
    %s251 = sphi 0, %s249
    %s252 = sphi 0, %s251
    %s266 = sphi 0, %s252
    %s270 = sphi 0, %s270
    %s272 = sphi 0, %s270
    %s273 = sphi 0, %s272
    %s287 = sphi 0, %s273
    %s291 = sphi 0, %s291
    %s293 = sphi 0, %s291
    %s294 = sphi 0, %s293
    %s308 = sphi 0, %s294
    %s314 = sphi 0, %s316
    %s317 = sphi 0, %s314
    %s318 = sphi 0, %s317
    %s334 = sphi 0, %s318
  $region4: #{forward_element.7} parent=0 // loop_header_branch
    %24 = sbr.rel (%p22) target = $region8
  $region5: #{forward_element.7} parent=0 // loop_body
    %s26 = ssub.s32 %s21, 1
    %s27 = ssub.s32 %s21, 2
    %s28 = sadd.s32 %s21, 1
    %s29 = ssub.s32 %s21, %s28
    %p30 = scmp.eq.s32.totalorder %s29, 0
    %s32 = sadd.s32 %s31, 1
    %s33 = scalar_select %p30, %s31, %s32
    %p36 = pneg %p30
    %p37 = scmp.eq.s32.totalorder %s21, 1
    %p38 = por %p36, %p37
    %p39 = scmp.ne.s32.totalorder %s31, %s34
    %p40 = scmp.eq.s32.totalorder %s21, 0
    %p41 = por %p39, %p40
    %p42 = scmp.ne.s32.totalorder %s31, %s34
    %p43 = scmp.eq.s32.totalorder %s26, 1
    %p44 = por %p42, %p43
    %p45 = scmp.ne.s32.totalorder %s34, %s35
    %p46 = scmp.eq.s32.totalorder %s26, 0
    %p47 = por %p45, %p46
    %p48 = scmp.ne.s32.totalorder %s34, %s35
    %p49 = scmp.eq.s32.totalorder %s27, 1
    %p50 = por %p48, %p49
    %p52 = scmp.ne.s32.totalorder %s35, %s51
    %p53 = scmp.eq.s32.totalorder %s27, 0
    %p54 = por %p52, %p53
    %s55 = ssub.s32 %s21, %s28
    %p56 = scmp.eq.s32.totalorder %s55, 0
    %s58 = sadd.s32 %s57, 1
    %s59 = scalar_select %p56, %s57, %s58
    %p62 = pneg %p56
    %p63 = scmp.eq.s32.totalorder %s21, 1
    %p64 = por %p62, %p63
    %p65 = scmp.ne.s32.totalorder %s57, %s60
    %p66 = scmp.eq.s32.totalorder %s21, 0
    %p67 = por %p65, %p66
    %p68 = scmp.ne.s32.totalorder %s57, %s60
    %p69 = scmp.eq.s32.totalorder %s26, 1
    %p70 = por %p68, %p69
    %p71 = scmp.ne.s32.totalorder %s60, %s61
    %p72 = scmp.eq.s32.totalorder %s26, 0
    %p73 = por %p71, %p72
    %p74 = scmp.ne.s32.totalorder %s60, %s61
    %p75 = scmp.eq.s32.totalorder %s27, 1
    %p76 = por %p74, %p75
    %p78 = scmp.ne.s32.totalorder %s61, %s77
    %p79 = scmp.eq.s32.totalorder %s27, 0
    %p80 = por %p78, %p79
    %s82 = sadd.s32 %s81, 1
    %p85 = scmp.eq.s32.totalorder %s21, 1
    %p86 = scmp.ne.s32.totalorder %s81, %s83
    %p87 = scmp.eq.s32.totalorder %s21, 0
    %p88 = por %p86, %p87
    %p89 = scmp.ne.s32.totalorder %s81, %s83
    %p90 = scmp.eq.s32.totalorder %s26, 1
    %p91 = por %p89, %p90
    %p92 = scmp.ne.s32.totalorder %s83, %s84
    %p93 = scmp.eq.s32.totalorder %s26, 0
    %p94 = por %p92, %p93
    %p95 = scmp.ne.s32.totalorder %s83, %s84
    %p96 = scmp.eq.s32.totalorder %s27, 1
    %p97 = por %p95, %p96
    %p99 = scmp.ne.s32.totalorder %s84, %s98
    %p100 = scmp.eq.s32.totalorder %s27, 0
    %p101 = por %p99, %p100
    %s103 = sadd.s32 %s102, 1
    %p106 = scmp.eq.s32.totalorder %s21, 1
    %p107 = scmp.ne.s32.totalorder %s102, %s104
    %p108 = scmp.eq.s32.totalorder %s21, 0
    %p109 = por %p107, %p108
    %p110 = scmp.ne.s32.totalorder %s102, %s104
    %p111 = scmp.eq.s32.totalorder %s26, 1
    %p112 = por %p110, %p111
    %p113 = scmp.ne.s32.totalorder %s104, %s105
    %p114 = scmp.eq.s32.totalorder %s26, 0
    %p115 = por %p113, %p114
    %p116 = scmp.ne.s32.totalorder %s104, %s105
    %p117 = scmp.eq.s32.totalorder %s27, 1
    %p118 = por %p116, %p117
    %p120 = scmp.ne.s32.totalorder %s105, %s119
    %p121 = scmp.eq.s32.totalorder %s27, 0
    %p122 = por %p120, %p121
    %s124 = sadd.s32 %s123, 1
    %p127 = scmp.eq.s32.totalorder %s21, 1
    %p128 = scmp.ne.s32.totalorder %s123, %s125
    %p129 = scmp.eq.s32.totalorder %s21, 0
    %p130 = por %p128, %p129
    %p131 = scmp.ne.s32.totalorder %s123, %s125
    %p132 = scmp.eq.s32.totalorder %s26, 1
    %p133 = por %p131, %p132
    %p134 = scmp.ne.s32.totalorder %s125, %s126
    %p135 = scmp.eq.s32.totalorder %s26, 0
    %p136 = por %p134, %p135
    %p137 = scmp.ne.s32.totalorder %s125, %s126
    %p138 = scmp.eq.s32.totalorder %s27, 1
    %p139 = por %p137, %p138
    %p141 = scmp.ne.s32.totalorder %s126, %s140
    %p142 = scmp.eq.s32.totalorder %s27, 0
    %p143 = por %p141, %p142
    %s145 = sadd.s32 %s144, 1
    %p148 = scmp.eq.s32.totalorder %s21, 1
    %p149 = scmp.ne.s32.totalorder %s144, %s146
    %p150 = scmp.eq.s32.totalorder %s21, 0
    %p151 = por %p149, %p150
    %p152 = scmp.ne.s32.totalorder %s144, %s146
    %p153 = scmp.eq.s32.totalorder %s26, 1
    %p154 = por %p152, %p153
    %p155 = scmp.ne.s32.totalorder %s146, %s147
    %p156 = scmp.eq.s32.totalorder %s26, 0
    %p157 = por %p155, %p156
    %p158 = scmp.ne.s32.totalorder %s146, %s147
    %p159 = scmp.eq.s32.totalorder %s27, 1
    %p160 = por %p158, %p159
    %p162 = scmp.ne.s32.totalorder %s147, %s161
    %p163 = scmp.eq.s32.totalorder %s27, 0
    %p164 = por %p162, %p163
    %s166 = sadd.s32 %s165, 1
    %p169 = scmp.eq.s32.totalorder %s21, 1
    %p170 = scmp.ne.s32.totalorder %s165, %s167
    %p171 = scmp.eq.s32.totalorder %s21, 0
    %p172 = por %p170, %p171
    %p173 = scmp.ne.s32.totalorder %s165, %s167
    %p174 = scmp.eq.s32.totalorder %s26, 1
    %p175 = por %p173, %p174
    %p176 = scmp.ne.s32.totalorder %s167, %s168
    %p177 = scmp.eq.s32.totalorder %s26, 0
    %p178 = por %p176, %p177
    %p179 = scmp.ne.s32.totalorder %s167, %s168
    %p180 = scmp.eq.s32.totalorder %s27, 1
    %p181 = por %p179, %p180
    %p183 = scmp.ne.s32.totalorder %s168, %s182
    %p184 = scmp.eq.s32.totalorder %s27, 0
    %p185 = por %p183, %p184
    %s187 = sadd.s32 %s186, 1
    %p190 = scmp.eq.s32.totalorder %s21, 1
    %p191 = scmp.ne.s32.totalorder %s186, %s188
    %p192 = scmp.eq.s32.totalorder %s21, 0
    %p193 = por %p191, %p192
    %p194 = scmp.ne.s32.totalorder %s186, %s188
    %p195 = scmp.eq.s32.totalorder %s26, 1
    %p196 = por %p194, %p195
    %p197 = scmp.ne.s32.totalorder %s188, %s189
    %p198 = scmp.eq.s32.totalorder %s26, 0
    %p199 = por %p197, %p198
    %p200 = scmp.ne.s32.totalorder %s188, %s189
    %p201 = scmp.eq.s32.totalorder %s27, 1
    %p202 = por %p200, %p201
    %p204 = scmp.ne.s32.totalorder %s189, %s203
    %p205 = scmp.eq.s32.totalorder %s27, 0
    %p206 = por %p204, %p205
    %s208 = sadd.s32 %s207, 1
    %p211 = scmp.eq.s32.totalorder %s21, 1
    %p212 = scmp.ne.s32.totalorder %s207, %s209
    %p213 = scmp.eq.s32.totalorder %s21, 0
    %p214 = por %p212, %p213
    %p215 = scmp.ne.s32.totalorder %s207, %s209
    %p216 = scmp.eq.s32.totalorder %s26, 1
    %p217 = por %p215, %p216
    %p218 = scmp.ne.s32.totalorder %s209, %s210
    %p219 = scmp.eq.s32.totalorder %s26, 0
    %p220 = por %p218, %p219
    %p221 = scmp.ne.s32.totalorder %s209, %s210
    %p222 = scmp.eq.s32.totalorder %s27, 1
    %p223 = por %p221, %p222
    %p225 = scmp.ne.s32.totalorder %s210, %s224
    %p226 = scmp.eq.s32.totalorder %s27, 0
    %p227 = por %p225, %p226
    %s229 = sadd.s32 %s228, 1
    %p232 = scmp.eq.s32.totalorder %s21, 1
    %p233 = scmp.ne.s32.totalorder %s228, %s230
    %p234 = scmp.eq.s32.totalorder %s21, 0
    %p235 = por %p233, %p234
    %p236 = scmp.ne.s32.totalorder %s228, %s230
    %p237 = scmp.eq.s32.totalorder %s26, 1
    %p238 = por %p236, %p237
    %p239 = scmp.ne.s32.totalorder %s230, %s231
    %p240 = scmp.eq.s32.totalorder %s26, 0
    %p241 = por %p239, %p240
    %p242 = scmp.ne.s32.totalorder %s230, %s231
    %p243 = scmp.eq.s32.totalorder %s27, 1
    %p244 = por %p242, %p243
    %p246 = scmp.ne.s32.totalorder %s231, %s245
    %p247 = scmp.eq.s32.totalorder %s27, 0
    %p248 = por %p246, %p247
    %s250 = sadd.s32 %s249, 1
    %p253 = scmp.eq.s32.totalorder %s21, 1
    %p254 = scmp.ne.s32.totalorder %s249, %s251
    %p255 = scmp.eq.s32.totalorder %s21, 0
    %p256 = por %p254, %p255
    %p257 = scmp.ne.s32.totalorder %s249, %s251
    %p258 = scmp.eq.s32.totalorder %s26, 1
    %p259 = por %p257, %p258
    %p260 = scmp.ne.s32.totalorder %s251, %s252
    %p261 = scmp.eq.s32.totalorder %s26, 0
    %p262 = por %p260, %p261
    %p263 = scmp.ne.s32.totalorder %s251, %s252
    %p264 = scmp.eq.s32.totalorder %s27, 1
    %p265 = por %p263, %p264
    %p267 = scmp.ne.s32.totalorder %s252, %s266
    %p268 = scmp.eq.s32.totalorder %s27, 0
    %p269 = por %p267, %p268
    %s271 = sadd.s32 %s270, 1
    %p274 = scmp.eq.s32.totalorder %s21, 1
    %p275 = scmp.ne.s32.totalorder %s270, %s272
    %p276 = scmp.eq.s32.totalorder %s21, 0
    %p277 = por %p275, %p276
    %p278 = scmp.ne.s32.totalorder %s270, %s272
    %p279 = scmp.eq.s32.totalorder %s26, 1
    %p280 = por %p278, %p279
    %p281 = scmp.ne.s32.totalorder %s272, %s273
    %p282 = scmp.eq.s32.totalorder %s26, 0
    %p283 = por %p281, %p282
    %p284 = scmp.ne.s32.totalorder %s272, %s273
    %p285 = scmp.eq.s32.totalorder %s27, 1
    %p286 = por %p284, %p285
    %p288 = scmp.ne.s32.totalorder %s273, %s287
    %p289 = scmp.eq.s32.totalorder %s27, 0
    %p290 = por %p288, %p289
    %s292 = sadd.s32 %s291, 1
    %p295 = scmp.eq.s32.totalorder %s21, 1
    %p296 = scmp.ne.s32.totalorder %s291, %s293
    %p297 = scmp.eq.s32.totalorder %s21, 0
    %p298 = por %p296, %p297
    %p299 = scmp.ne.s32.totalorder %s291, %s293
    %p300 = scmp.eq.s32.totalorder %s26, 1
    %p301 = por %p299, %p300
    %p302 = scmp.ne.s32.totalorder %s293, %s294
    %p303 = scmp.eq.s32.totalorder %s26, 0
    %p304 = por %p302, %p303
    %p305 = scmp.ne.s32.totalorder %s293, %s294
    %p306 = scmp.eq.s32.totalorder %s27, 1
    %p307 = por %p305, %p306
    %p309 = scmp.ne.s32.totalorder %s294, %s308
    %p310 = scmp.eq.s32.totalorder %s27, 0
    %p311 = por %p309, %p310
    %s312 = ssub.s32 %s21, %s28
    %p313 = scmp.eq.s32.totalorder %s312, 0
    %s315 = sadd.s32 %s314, 1
    %s316 = scalar_select %p313, %s314, %s315
    %p319 = pneg %p313
    %p320 = scmp.eq.s32.totalorder %s21, 1
    %p321 = por %p319, %p320
    %p322 = scmp.ne.s32.totalorder %s314, %s317
    %p323 = scmp.eq.s32.totalorder %s21, 0
    %p324 = por %p322, %p323
    %p325 = scmp.ne.s32.totalorder %s314, %s317
    %p326 = scmp.eq.s32.totalorder %s26, 1
    %p327 = por %p325, %p326
    %p328 = scmp.ne.s32.totalorder %s317, %s318
    %p329 = scmp.eq.s32.totalorder %s26, 0
    %p330 = por %p328, %p329
    %p331 = scmp.ne.s32.totalorder %s317, %s318
    %p332 = scmp.eq.s32.totalorder %s27, 1
    %p333 = por %p331, %p332
    %p335 = scmp.ne.s32.totalorder %s318, %s334
    %p336 = scmp.eq.s32.totalorder %s27, 0
    %p337 = por %p335, %p336
    %p338 = scmp.le.s32.totalorder 1, %s21
    %p339 = scmp.lt.s32.totalorder %s21, 3
    %p340 = pnand %p338, %p339
    %p341 = pneg %p340
    // Predicated region
    $region9: #{forward_element.7} parent=5 // pred_check
      _
    $region10: #{forward_element.7} parent=5 // pred_check_branch
      %343 = sbr.rel (%p340) target = $region12
    $region11: #{forward_element.7} parent=5 // pred_region
      %s344 = ssub.s32 %s21, 1
      // Predicated region
      $region13: #{forward_element.7} parent=11 // pred_check
        %p345 = pneg %p94
      $region14: #{forward_element.7} parent=11 // pred_check_branch
        %347 = sbr.rel (%p345) target = $region16
      $region15: #{forward_element.7} parent=11 // pred_region
        _
      $region16: #{forward_element.7} parent=11 // pred_fallthru
        _
      // Predicated region
      $region17: #{forward_element.7} parent=11 // pred_check
        %p348 = pneg %p115
      $region18: #{forward_element.7} parent=11 // pred_check_branch
        %350 = sbr.rel (%p348) target = $region20
      $region19: #{forward_element.7} parent=11 // pred_region
        _
      $region20: #{forward_element.7} parent=11 // pred_fallthru
        _
      // Predicated region
      $region21: #{forward_element.7} parent=11 // pred_check
        %p351 = pneg %p136
      $region22: #{forward_element.7} parent=11 // pred_check_branch
        %353 = sbr.rel (%p351) target = $region24
      $region23: #{forward_element.7} parent=11 // pred_region
        _
      $region24: #{forward_element.7} parent=11 // pred_fallthru
        _
      // Predicated region
      $region25: #{forward_element.7} parent=11 // pred_check
        %p354 = pneg %p157
      $region26: #{forward_element.7} parent=11 // pred_check_branch
        %356 = sbr.rel (%p354) target = $region28
      $region27: #{forward_element.7} parent=11 // pred_region
        _
      $region28: #{forward_element.7} parent=11 // pred_fallthru
        _
      // Predicated region
      $region29: #{forward_element.7} parent=11 // pred_check
        %p357 = pneg %p178
      $region30: #{forward_element.7} parent=11 // pred_check_branch
        %359 = sbr.rel (%p357) target = $region32
      $region31: #{forward_element.7} parent=11 // pred_region
        _
      $region32: #{forward_element.7} parent=11 // pred_fallthru
        _
      // Predicated region
      $region33: #{forward_element.7} parent=11 // pred_check
        %p360 = pneg %p199
      $region34: #{forward_element.7} parent=11 // pred_check_branch
        %362 = sbr.rel (%p360) target = $region36
      $region35: #{forward_element.7} parent=11 // pred_region
        _
      $region36: #{forward_element.7} parent=11 // pred_fallthru
        _
      // Predicated region
      $region37: #{forward_element.7} parent=11 // pred_check
        %p363 = pneg %p220
      $region38: #{forward_element.7} parent=11 // pred_check_branch
        %365 = sbr.rel (%p363) target = $region40
      $region39: #{forward_element.7} parent=11 // pred_region
        _
      $region40: #{forward_element.7} parent=11 // pred_fallthru
        _
      // Predicated region
      $region41: #{forward_element.7} parent=11 // pred_check
        %p366 = pneg %p241
      $region42: #{forward_element.7} parent=11 // pred_check_branch
        %368 = sbr.rel (%p366) target = $region44
      $region43: #{forward_element.7} parent=11 // pred_region
        _
      $region44: #{forward_element.7} parent=11 // pred_fallthru
        _
      // Predicated region
      $region45: #{forward_element.7} parent=11 // pred_check
        %p369 = pneg %p262
      $region46: #{forward_element.7} parent=11 // pred_check_branch
        %371 = sbr.rel (%p369) target = $region48
      $region47: #{forward_element.7} parent=11 // pred_region
        _
      $region48: #{forward_element.7} parent=11 // pred_fallthru
        _
      // Predicated region
      $region49: #{forward_element.7} parent=11 // pred_check
        %p372 = pneg %p283
      $region50: #{forward_element.7} parent=11 // pred_check_branch
        %374 = sbr.rel (%p372) target = $region52
      $region51: #{forward_element.7} parent=11 // pred_region
        _
      $region52: #{forward_element.7} parent=11 // pred_fallthru
        _
      // Predicated region
      $region53: #{forward_element.7} parent=11 // pred_check
        %p375 = pneg %p304
      $region54: #{forward_element.7} parent=11 // pred_check_branch
        %377 = sbr.rel (%p375) target = $region56
      $region55: #{forward_element.7} parent=11 // pred_region
        _
      $region56: #{forward_element.7} parent=11 // pred_fallthru
        _
    $region12: #{forward_element.7} parent=5 // pred_fallthru
      _
    %p378 = scmp.lt.s32.totalorder %s21, 2
    // Predicated region
    $region57: #{forward_element.7} parent=5 // pred_check
      %p379 = pneg %p378
    $region58: #{forward_element.7} parent=5 // pred_check_branch
      %381 = sbr.rel (%p379) target = $region60
    $region59: #{forward_element.7} parent=5 // pred_region
      // Predicated region
      $region61: #{forward_element.7} parent=59 // pred_check
        %p382 = pneg %p41
      $region62: #{forward_element.7} parent=59 // pred_check_branch
        %384 = sbr.rel (%p382) target = $region64
      $region63: #{forward_element.7} parent=59 // pred_region
        %p385 = scmp.lt.s32.totalorder %s21, 1
        %s386 = scalar_select %p385, %s21, 1
        %s387 = smul.addr %s386, 4
        %s388 = scalar_lea.vmem %s0, %s387
      $region64: #{forward_element.7} parent=59 // pred_fallthru
        _
      // Predicated region
      $region65: #{forward_element.7} parent=59 // pred_check
        %p389 = pneg %p67
      $region66: #{forward_element.7} parent=59 // pred_check_branch
        %391 = sbr.rel (%p389) target = $region68
      $region67: #{forward_element.7} parent=59 // pred_region
        %p392 = scmp.lt.s32.totalorder %s21, 1
        %s393 = scalar_select %p392, %s21, 1
        %s394 = smul.addr %s393, 4
        %s395 = scalar_lea.vmem %s1, %s394
      $region68: #{forward_element.7} parent=59 // pred_fallthru
        _
    $region60: #{forward_element.7} parent=5 // pred_fallthru
      _
    %p396 = scmp.le.s32.totalorder 1, %s21
    %p397 = scmp.lt.s32.totalorder %s21, 3
    %p398 = pnand %p396, %p397
    %p399 = pneg %p398
    // Predicated region
    $region69: #{forward_element.7} parent=5 // pred_check
      _
    $region70: #{forward_element.7} parent=5 // pred_check_branch
      %401 = sbr.rel (%p398) target = $region72
    $region71: #{forward_element.7} parent=5 // pred_region
      %s402 = ssub.s32 %s21, 1
      %p403 = scmp.lt.s32.totalorder %s26, 1
      %s404 = scalar_select %p403, %s26, 1
      %s405 = smul.addr %s404, 4
      %s406 = scalar_lea.vmem %s0, %s405
      %p407 = pneg %p47
      %p408 = pneg %p44
      %p409 = scmp.lt.s32.totalorder %s26, 1
      %s410 = scalar_select %p409, %s26, 1
      %s411 = smul.addr %s410, 4
      %s412 = scalar_lea.vmem %s1, %s411
      %p413 = pneg %p73
      %p414 = pneg %p70
      %p415 = pneg %p94
      %p416 = pneg %p91
      %p417 = pneg %p115
      %p418 = pneg %p112
      %p419 = pneg %p136
      %p420 = pneg %p133
      %p421 = pneg %p157
      %p422 = pneg %p154
      %p423 = pneg %p178
      %p424 = pneg %p175
      %p425 = pneg %p199
      %p426 = pneg %p196
      %p427 = pneg %p220
      %p428 = pneg %p217
      %p429 = pneg %p241
      %p430 = pneg %p238
      %p431 = pneg %p262
      %p432 = pneg %p259
      %p433 = pneg %p283
      %p434 = pneg %p280
      %p435 = pneg %p304
      %p436 = pneg %p301
      %p437 = pneg %p330
      %p438 = pneg %p327
      %p439 = scmp.lt.s32.totalorder %s26, 1
      %s440 = scalar_select %p439, %s26, 1
      %s441 = smul.addr %s440, 4
      %s442 = scalar_lea.vmem %s13, %s441
      %p443 = scmp.lt.s32.totalorder %s26, 1
      %s444 = scalar_select %p443, %s26, 1
      %s445 = smul.addr %s444, 4
      %s446 = scalar_lea.vmem %s0, %s445
      %p447 = scmp.lt.s32.totalorder %s26, 1
      %s448 = scalar_select %p447, %s26, 1
      %s449 = smul.addr %s448, 4
      %s450 = scalar_lea.vmem %s1, %s449
      %p451 = scmp.lt.s32.totalorder %s26, 1
      %s452 = scalar_select %p451, %s26, 1
      %s453 = smul.addr %s452, 4
      %s454 = scalar_lea.vmem %s13, %s453
      %p455 = scmp.eq.s32.totalorder %s26, 0
      // Predicated region
      $region73: #{forward_element.7} parent=71 // pred_check
        %p456 = pneg %p455
      $region74: #{forward_element.7} parent=71 // pred_check_branch
        %458 = sbr.rel (%p456) target = $region76
      $region75: #{forward_element.7} parent=71 // pred_region
        %v459 = vld [vmem:[%s4] sm:$0x1]
        %vm460 = vcmask 253952
        %461 = vst.msk [vmem:[#allocation2] sm:$0x1] %vm460, %v459
      $region76: #{forward_element.7} parent=71 // pred_fallthru
        _
      %v462 = vld [vmem:[%s446] sm:$0xf]
      %v463 = vld [vmem:[%s450] sm:$0xf]
      %v464 = vld [vmem:[%s2] sm:$0x1]
      %v466 = vlaneseq
      %v467 = vshrl.u32 %v466, 7
      %v468 = vsub.s32 0, %v467
      %v469 = vrot.slane %v464, %v468
      %v471 = vadd.f32 %v469, %v462
      %v472 = vld [vmem:[%s3] sm:$0x1]
      %v474 = vlaneseq
      %v475 = vshrl.u32 %v474, 7
      %v476 = vsub.s32 0, %v475
      %v477 = vrot.slane %v472, %v476
      %480 = vrot.lane.b32.xlu0 %v471, 32
      %v481 = vpop.permute.xlu0 %480
      %484 = vrot.lane.b32.xlu0 %v463, 48
      %v485 = vpop.permute.xlu0 %484
      %vm487 = vcmask 261120
      %v488 = vsel %vm487, %v477, %v481
      %vm489 = vcmask 392192
      %v490 = vsel %vm489, %v488, %v485
      %v491 = vld [vmem:[%s5] sm:$0xff]
      %v492 = vld [vmem:[%s5 + $0x8] sm:$0xff]
      %v493 = vld [vmem:[%s5 + $0x10] sm:$0xff]
      %v494 = vld [vmem:[%s5 + $0x18] sm:$0xff]
      %v495 = vld [vmem:[%s5 + $0x20] sm:$0xff]
      %v496 = vld [vmem:[%s5 + $0x28] sm:$0xff]
      %v497 = vld [vmem:[%s5 + $0x30] sm:$0xff]
      %v498 = vld [vmem:[%s5 + $0x38] sm:$0xff]
      %v499 = vld [vmem:[%s6] sm:$0x1]
      %v501 = vlaneseq
      %v502 = vshrl.u32 %v501, 7
      %v503 = vsub.s32 0, %v502
      %v504 = vrot.slane %v499, %v503
      %vm506 = vcmask 523264
      %v508 = vsel %vm506, %v490, 0
      %510 = vmatprep.subr.mxu0 0.0
      %511 = vmatpush1.msra.mxu0 %v491
      %512 = vmatprep.subr.mxu0 0.0
      %513 = vmatpush1.msra.mxu0 %v492
      %514 = vmatprep.subr.mxu0 0.0
      %515 = vmatpush1.msra.mxu0 %v493
      %516 = vmatprep.subr.mxu0 0.0
      %517 = vmatpush1.msra.mxu0 %v494
      %518 = vmatprep.subr.mxu0 0.0
      %519 = vmatpush1.msra.mxu0 %v495
      %520 = vmatprep.subr.mxu0 0.0
      %521 = vmatpush1.msra.mxu0 %v496
      %522 = vmatprep.subr.mxu0 0.0
      %523 = vmatpush1.msra.mxu0 %v497
      %524 = vmatprep.subr.mxu0 0.0
      %525 = vmatpush1.msra.mxu0 %v498
      %526 = vmatprep.subr.mxu0 0.0
      %527 = vmatpush1.msra.mxu0 0.0
      %528 = vmatprep.subr.mxu0 0.0
      %529 = vmatpush1.msra.mxu0 0.0
      %530 = vmatprep.subr.mxu0 0.0
      %531 = vmatpush1.msra.mxu0 0.0
      %532 = vmatprep.subr.mxu0 0.0
      %533 = vmatpush1.msra.mxu0 0.0
      %534 = vmatprep.subr.mxu0 0.0
      %535 = vmatpush1.msra.mxu0 0.0
      %536 = vmatprep.subr.mxu0 0.0
      %537 = vmatpush1.msra.mxu0 0.0
      %538 = vmatprep.subr.mxu0 0.0
      %539 = vmatpush1.msra.mxu0 0.0
      %540 = vmatprep.subr.mxu0 0.0
      %541 = vmatpush1.msra.mxu0 0.0
      %542 = vmatprep.subr.mxu0 0.0
      %543 = vmatpush1.msra.mxu0 0.0
      %544 = vmatprep.subr.mxu0 0.0
      %545 = vmatpush1.msra.mxu0 0.0
      %546 = vmatprep.subr.mxu0 0.0
      %547 = vmatpush1.msra.mxu0 0.0
      %548 = vmatprep.subr.mxu0 0.0
      %549 = vmatpush1.msra.mxu0 0.0
      %550 = vmatprep.subr.mxu0 0.0
      %551 = vmatpush1.msra.mxu0 0.0
      %552 = vmatprep.subr.mxu0 0.0
      %553 = vmatpush1.msra.mxu0 0.0
      %554 = vmatprep.subr.mxu0 0.0
      %555 = vmatpush1.msra.mxu0 0.0
      %556 = vmatprep.subr.mxu0 0.0
      %557 = vmatpush1.msra.mxu0 0.0
      %558 = vmatprep.subr.mxu0 0.0
      %559 = vmatpush1.msra.mxu0 0.0
      %560 = vmatprep.subr.mxu0 0.0
      %561 = vmatpush1.msra.mxu0 0.0
      %562 = vmatprep.subr.mxu0 0.0
      %563 = vmatpush1.msra.mxu0 0.0
      %564 = vmatprep.subr.mxu0 0.0
      %565 = vmatpush1.msra.mxu0 0.0
      %566 = vmatprep.subr.mxu0 0.0
      %567 = vmatpush1.msra.mxu0 0.0
      %568 = vmatprep.subr.mxu0 0.0
      %569 = vmatpush1.msra.mxu0 0.0
      %570 = vmatprep.subr.mxu0 0.0
      %571 = vmatpush1.msra.mxu0 0.0
      %572 = vmatprep.subr.mxu0 0.0
      %573 = vmatpush1.msra.mxu0 0.0
      %574 = vmatprep.mubr.f32.mxu0 0.0
      %575 = vmatmul.mubr.f32.gmra.mrb[0].mxu0 %v508
      %v576 = vpop.f32.mrb[0].mxu0
      %v577 = vadd.f32 %v504, %v576
      %v578 = vpop.f32.mrb[0].mxu0
      %579 = vdwg.mxu0
      %v580 = vmax.f32 %v577, 0.0
      %v581 = vld [vmem:[%s7] sm:$0xff]
      %v582 = vld [vmem:[%s7 + $0x8] sm:$0xff]
      %v583 = vld [vmem:[%s7 + $0x10] sm:$0xff]
      %v584 = vld [vmem:[%s7 + $0x18] sm:$0xff]
      %v585 = vld [vmem:[%s7 + $0x20] sm:$0xff]
      %v586 = vld [vmem:[%s7 + $0x28] sm:$0xff]
      %v587 = vld [vmem:[%s7 + $0x30] sm:$0xff]
      %v588 = vld [vmem:[%s7 + $0x38] sm:$0xff]
      %v589 = vld [vmem:[%s8] sm:$0x1]
      %v591 = vlaneseq
      %v592 = vshrl.u32 %v591, 7
      %v593 = vsub.s32 0, %v592
      %v594 = vrot.slane %v589, %v593
      %v597 = vsel %vm506, %v580, 0
      %599 = vmatprep.subr.mxu0 0.0
      %600 = vmatpush1.msra.mxu0 %v581
      %601 = vmatprep.subr.mxu0 0.0
      %602 = vmatpush1.msra.mxu0 %v582
      %603 = vmatprep.subr.mxu0 0.0
      %604 = vmatpush1.msra.mxu0 %v583
      %605 = vmatprep.subr.mxu0 0.0
      %606 = vmatpush1.msra.mxu0 %v584
      %607 = vmatprep.subr.mxu0 0.0
      %608 = vmatpush1.msra.mxu0 %v585
      %609 = vmatprep.subr.mxu0 0.0
      %610 = vmatpush1.msra.mxu0 %v586
      %611 = vmatprep.subr.mxu0 0.0
      %612 = vmatpush1.msra.mxu0 %v587
      %613 = vmatprep.subr.mxu0 0.0
      %614 = vmatpush1.msra.mxu0 %v588
      %615 = vmatprep.subr.mxu0 0.0
      %616 = vmatpush1.msra.mxu0 0.0
      %617 = vmatprep.subr.mxu0 0.0
      %618 = vmatpush1.msra.mxu0 0.0
      %619 = vmatprep.subr.mxu0 0.0
      %620 = vmatpush1.msra.mxu0 0.0
      %621 = vmatprep.subr.mxu0 0.0
      %622 = vmatpush1.msra.mxu0 0.0
      %623 = vmatprep.subr.mxu0 0.0
      %624 = vmatpush1.msra.mxu0 0.0
      %625 = vmatprep.subr.mxu0 0.0
      %626 = vmatpush1.msra.mxu0 0.0
      %627 = vmatprep.subr.mxu0 0.0
      %628 = vmatpush1.msra.mxu0 0.0
      %629 = vmatprep.subr.mxu0 0.0
      %630 = vmatpush1.msra.mxu0 0.0
      %631 = vmatprep.subr.mxu0 0.0
      %632 = vmatpush1.msra.mxu0 0.0
      %633 = vmatprep.subr.mxu0 0.0
      %634 = vmatpush1.msra.mxu0 0.0
      %635 = vmatprep.subr.mxu0 0.0
      %636 = vmatpush1.msra.mxu0 0.0
      %637 = vmatprep.subr.mxu0 0.0
      %638 = vmatpush1.msra.mxu0 0.0
      %639 = vmatprep.subr.mxu0 0.0
      %640 = vmatpush1.msra.mxu0 0.0
      %641 = vmatprep.subr.mxu0 0.0
      %642 = vmatpush1.msra.mxu0 0.0
      %643 = vmatprep.subr.mxu0 0.0
      %644 = vmatpush1.msra.mxu0 0.0
      %645 = vmatprep.subr.mxu0 0.0
      %646 = vmatpush1.msra.mxu0 0.0
      %647 = vmatprep.subr.mxu0 0.0
      %648 = vmatpush1.msra.mxu0 0.0
      %649 = vmatprep.subr.mxu0 0.0
      %650 = vmatpush1.msra.mxu0 0.0
      %651 = vmatprep.subr.mxu0 0.0
      %652 = vmatpush1.msra.mxu0 0.0
      %653 = vmatprep.subr.mxu0 0.0
      %654 = vmatpush1.msra.mxu0 0.0
      %655 = vmatprep.subr.mxu0 0.0
      %656 = vmatpush1.msra.mxu0 0.0
      %657 = vmatprep.subr.mxu0 0.0
      %658 = vmatpush1.msra.mxu0 0.0
      %659 = vmatprep.subr.mxu0 0.0
      %660 = vmatpush1.msra.mxu0 0.0
      %661 = vmatprep.subr.mxu0 0.0
      %662 = vmatpush1.msra.mxu0 0.0
      %663 = vmatprep.mubr.f32.mxu0 0.0
      %664 = vmatmul.mubr.f32.gmra.mrb[0].mxu0 %v597
      %v665 = vpop.f32.mrb[0].mxu0
      %v666 = vadd.f32 %v594, %v665
      %v667 = vpop.f32.mrb[0].mxu0
      %668 = vdwg.mxu0
      %v669 = vld [vmem:[#allocation2] sm:$0x1]
      %v671 = vlaneseq
      %v672 = vshrl.u32 %v671, 7
      %v673 = vsub.s32 0, %v672
      %v674 = vrot.slane %v669, %v673
      %675 = vrot.lane.b32.xlu0 %v674, 32
      %v676 = vpop.permute.xlu0 %675
      %v678 = vsel %vm487, %v666, %v676
      %v679 = vld [vmem:[%s9] sm:$0xff]
      %v680 = vld [vmem:[%s9 + $0x8] sm:$0xff]
      %v681 = vld [vmem:[%s9 + $0x10] sm:$0xff]
      %v682 = vld [vmem:[%s9 + $0x18] sm:$0xff]
      %v683 = vld [vmem:[%s9 + $0x20] sm:$0xff]
      %v684 = vld [vmem:[%s9 + $0x28] sm:$0xff]
      %v685 = vld [vmem:[%s9 + $0x30] sm:$0xff]
      %v686 = vld [vmem:[%s9 + $0x38] sm:$0xff]
      %v687 = vld [vmem:[%s9 + $0x40] sm:$0xff]
      %v688 = vld [vmem:[%s9 + $0x48] sm:$0xff]
      %v689 = vld [vmem:[%s9 + $0x50] sm:$0xff]
      %v690 = vld [vmem:[%s9 + $0x58] sm:$0xff]
      %v691 = vld [vmem:[%s9 + $0x60] sm:$0xff]
      %v692 = vld [vmem:[%s9 + $0x68] sm:$0xff]
      %v693 = vld [vmem:[%s9 + $0x70] sm:$0xff]
      %v694 = vld [vmem:[%s9 + $0x78] sm:$0xff]
      %v695 = vld [vmem:[%s10] sm:$0x3]
      %v697 = vlaneseq
      %v698 = vshrl.u32 %v697, 7
      %v699 = vsub.s32 0, %v698
      %v700 = vrot.slane %v695, %v699
      %v701 = vlaneseq
      %v702 = vshrl.u32 %v701, 7
      %v703 = vsub.s32 1, %v702
      %v704 = vrot.slane %v695, %v703
      %v708 = vsel %vm506, %v678, 0
      %710 = vmatprep.subr.mxu0 %v680
      %711 = vmatpush1.msra.mxu0 %v679
      %712 = vmatprep.subr.mxu0 %v682
      %713 = vmatpush1.msra.mxu0 %v681
      %714 = vmatprep.subr.mxu0 %v684
      %715 = vmatpush1.msra.mxu0 %v683
      %716 = vmatprep.subr.mxu0 %v686
      %717 = vmatpush1.msra.mxu0 %v685
      %718 = vmatprep.subr.mxu0 %v688
      %719 = vmatpush1.msra.mxu0 %v687
      %720 = vmatprep.subr.mxu0 %v690
      %721 = vmatpush1.msra.mxu0 %v689
      %722 = vmatprep.subr.mxu0 %v692
      %723 = vmatpush1.msra.mxu0 %v691
      %724 = vmatprep.subr.mxu0 %v694
      %725 = vmatpush1.msra.mxu0 %v693
      %726 = vmatprep.subr.mxu0 0.0
      %727 = vmatpush1.msra.mxu0 0.0
      %728 = vmatprep.subr.mxu0 0.0
      %729 = vmatpush1.msra.mxu0 0.0
      %730 = vmatprep.subr.mxu0 0.0
      %731 = vmatpush1.msra.mxu0 0.0
      %732 = vmatprep.subr.mxu0 0.0
      %733 = vmatpush1.msra.mxu0 0.0
      %734 = vmatprep.subr.mxu0 0.0
      %735 = vmatpush1.msra.mxu0 0.0
      %736 = vmatprep.subr.mxu0 0.0
      %737 = vmatpush1.msra.mxu0 0.0
      %738 = vmatprep.subr.mxu0 0.0
      %739 = vmatpush1.msra.mxu0 0.0
      %740 = vmatprep.subr.mxu0 0.0
      %741 = vmatpush1.msra.mxu0 0.0
      %742 = vmatprep.subr.mxu0 0.0
      %743 = vmatpush1.msra.mxu0 0.0
      %744 = vmatprep.subr.mxu0 0.0
      %745 = vmatpush1.msra.mxu0 0.0
      %746 = vmatprep.subr.mxu0 0.0
      %747 = vmatpush1.msra.mxu0 0.0
      %748 = vmatprep.subr.mxu0 0.0
      %749 = vmatpush1.msra.mxu0 0.0
      %750 = vmatprep.subr.mxu0 0.0
      %751 = vmatpush1.msra.mxu0 0.0
      %752 = vmatprep.subr.mxu0 0.0
      %753 = vmatpush1.msra.mxu0 0.0
      %754 = vmatprep.subr.mxu0 0.0
      %755 = vmatpush1.msra.mxu0 0.0
      %756 = vmatprep.subr.mxu0 0.0
      %757 = vmatpush1.msra.mxu0 0.0
      %758 = vmatprep.subr.mxu0 0.0
      %759 = vmatpush1.msra.mxu0 0.0
      %760 = vmatprep.subr.mxu0 0.0
      %761 = vmatpush1.msra.mxu0 0.0
      %762 = vmatprep.subr.mxu0 0.0
      %763 = vmatpush1.msra.mxu0 0.0
      %764 = vmatprep.subr.mxu0 0.0
      %765 = vmatpush1.msra.mxu0 0.0
      %766 = vmatprep.subr.mxu0 0.0
      %767 = vmatpush1.msra.mxu0 0.0
      %768 = vmatprep.subr.mxu0 0.0
      %769 = vmatpush1.msra.mxu0 0.0
      %770 = vmatprep.subr.mxu0 0.0
      %771 = vmatpush1.msra.mxu0 0.0
      %772 = vmatprep.subr.mxu0 0.0
      %773 = vmatpush1.msra.mxu0 0.0
      %774 = vmatprep.mubr.f32.mxu0 0.0
      %775 = vmatmul.mubr.f32.gmra.mrb[0].mxu0 %v708
      %v776 = vpop.f32.mrb[0].mxu0
      %v777 = vadd.f32 %v700, %v776
      %v778 = vpop.f32.mrb[0].mxu0
      %v779 = vadd.f32 %v704, %v778
      %780 = vdwg.mxu0
      %v781 = vmax.f32 %v777, 0.0
      %v782 = vmax.f32 %v779, 0.0
      %v783 = vld [vmem:[%s11] sm:$0xff]
      %v784 = vld [vmem:[%s11 + $0x8] sm:$0xff]
      %v785 = vld [vmem:[%s11 + $0x10] sm:$0xff]
      %v786 = vld [vmem:[%s11 + $0x18] sm:$0xff]
      %v787 = vld [vmem:[%s11 + $0x20] sm:$0xff]
      %v788 = vld [vmem:[%s11 + $0x28] sm:$0xff]
      %v789 = vld [vmem:[%s11 + $0x30] sm:$0xff]
      %v790 = vld [vmem:[%s11 + $0x38] sm:$0xff]
      %v791 = vld [vmem:[%s11 + $0x40] sm:$0xff]
      %v792 = vld [vmem:[%s11 + $0x48] sm:$0xff]
      %v793 = vld [vmem:[%s11 + $0x50] sm:$0xff]
      %v794 = vld [vmem:[%s11 + $0x58] sm:$0xff]
      %v795 = vld [vmem:[%s11 + $0x60] sm:$0xff]
      %v796 = vld [vmem:[%s11 + $0x68] sm:$0xff]
      %v797 = vld [vmem:[%s11 + $0x70] sm:$0xff]
      %v798 = vld [vmem:[%s11 + $0x78] sm:$0xff]
      %v799 = vld [vmem:[%s11 + $0x80] sm:$0xff]
      %v800 = vld [vmem:[%s11 + $0x88] sm:$0xff]
      %v801 = vld [vmem:[%s11 + $0x90] sm:$0xff]
      %v802 = vld [vmem:[%s11 + $0x98] sm:$0xff]
      %v803 = vld [vmem:[%s11 + $0xa0] sm:$0xff]
      %v804 = vld [vmem:[%s11 + $0xa8] sm:$0xff]
      %v805 = vld [vmem:[%s11 + $0xb0] sm:$0xff]
      %v806 = vld [vmem:[%s11 + $0xb8] sm:$0xff]
      %v807 = vld [vmem:[%s11 + $0xc0] sm:$0xff]
      %v808 = vld [vmem:[%s11 + $0xc8] sm:$0xff]
      %v809 = vld [vmem:[%s11 + $0xd0] sm:$0xff]
      %v810 = vld [vmem:[%s11 + $0xd8] sm:$0xff]
      %v811 = vld [vmem:[%s11 + $0xe0] sm:$0xff]
      %v812 = vld [vmem:[%s11 + $0xe8] sm:$0xff]
      %v813 = vld [vmem:[%s11 + $0xf0] sm:$0xff]
      %v814 = vld [vmem:[%s11 + $0xf8] sm:$0xff]
      %v815 = vld [vmem:[#allocation3] sm:$0x1]
      %v817 = vlaneseq
      %v818 = vshrl.u32 %v817, 7
      %v819 = vsub.s32 0, %v818
      %v820 = vrot.slane %v815, %v819
      %822 = vmatprep.subr.mxu0 0.0
      %823 = vmatpush1.msra.mxu0 %v783
      %824 = vmatprep.subr.mxu0 0.0
      %825 = vmatpush1.msra.mxu0 %v784
      %826 = vmatprep.subr.mxu0 0.0
      %827 = vmatpush1.msra.mxu0 %v785
      %828 = vmatprep.subr.mxu0 0.0
      %829 = vmatpush1.msra.mxu0 %v786
      %830 = vmatprep.subr.mxu0 0.0
      %831 = vmatpush1.msra.mxu0 %v787
      %832 = vmatprep.subr.mxu0 0.0
      %833 = vmatpush1.msra.mxu0 %v788
      %834 = vmatprep.subr.mxu0 0.0
      %835 = vmatpush1.msra.mxu0 %v789
      %836 = vmatprep.subr.mxu0 0.0
      %837 = vmatpush1.msra.mxu0 %v790
      %838 = vmatprep.subr.mxu0 0.0
      %839 = vmatpush1.msra.mxu0 %v791
      %840 = vmatprep.subr.mxu0 0.0
      %841 = vmatpush1.msra.mxu0 %v792
      %842 = vmatprep.subr.mxu0 0.0
      %843 = vmatpush1.msra.mxu0 %v793
      %844 = vmatprep.subr.mxu0 0.0
      %845 = vmatpush1.msra.mxu0 %v794
      %846 = vmatprep.subr.mxu0 0.0
      %847 = vmatpush1.msra.mxu0 %v795
      %848 = vmatprep.subr.mxu0 0.0
      %849 = vmatpush1.msra.mxu0 %v796
      %850 = vmatprep.subr.mxu0 0.0
      %851 = vmatpush1.msra.mxu0 %v797
      %852 = vmatprep.subr.mxu0 0.0
      %853 = vmatpush1.msra.mxu0 %v798
      %854 = vmatprep.subr.mxu0 0.0
      %855 = vmatpush1.msra.mxu0 %v799
      %856 = vmatprep.subr.mxu0 0.0
      %857 = vmatpush1.msra.mxu0 %v800
      %858 = vmatprep.subr.mxu0 0.0
      %859 = vmatpush1.msra.mxu0 %v801
      %860 = vmatprep.subr.mxu0 0.0
      %861 = vmatpush1.msra.mxu0 %v802
      %862 = vmatprep.subr.mxu0 0.0
      %863 = vmatpush1.msra.mxu0 %v803
      %864 = vmatprep.subr.mxu0 0.0
      %865 = vmatpush1.msra.mxu0 %v804
      %866 = vmatprep.subr.mxu0 0.0
      %867 = vmatpush1.msra.mxu0 %v805
      %868 = vmatprep.subr.mxu0 0.0
      %869 = vmatpush1.msra.mxu0 %v806
      %870 = vmatprep.subr.mxu0 0.0
      %871 = vmatpush1.msra.mxu0 %v807
      %872 = vmatprep.subr.mxu0 0.0
      %873 = vmatpush1.msra.mxu0 %v808
      %874 = vmatprep.subr.mxu0 0.0
      %875 = vmatpush1.msra.mxu0 %v809
      %876 = vmatprep.subr.mxu0 0.0
      %877 = vmatpush1.msra.mxu0 %v810
      %878 = vmatprep.subr.mxu0 0.0
      %879 = vmatpush1.msra.mxu0 %v811
      %880 = vmatprep.subr.mxu0 0.0
      %881 = vmatpush1.msra.mxu0 %v812
      %882 = vmatprep.subr.mxu0 0.0
      %883 = vmatpush1.msra.mxu0 %v813
      %884 = vmatprep.subr.mxu0 0.0
      %885 = vmatpush1.msra.mxu0 %v814
      %886 = vmatprep.mubr.f32.mxu0 %v782
      %887 = vmatmul.mubr.f32.gmra.mrb[0].mxu0 %v781
      %v888 = vpop.f32.mrb[0].mxu0
      %v889 = vadd.f32 %v820, %v888
      %v890 = vpop.f32.mrb[0].mxu0
      %891 = vdwg.mxu0
      %vm892 = vcmask 3072
      %893 = vst.msk [vmem:[%s454] sm:$0xf] %vm892, %v889
      %v894 = vlaneseq
      %v895 = vshrl.u32 %v894, 7
      %v896 = vcvt.s32.f32 %v895
      %v897 = vsel %vm892, %v889, -inf
      %v898 = vrot.slane %v897, 4
      %v899 = vmax.f32 %v897, %v898
      %v900 = vrot.slane %v899, 2
      %v901 = vmax.f32 %v899, %v900
      %v902 = vrot.slane %v901, 1
      %v903 = vmax.f32 %v901, %v902
      %vm904 = vcmp.ge.f32.partialorder %v889, %v903
      %v905 = vsel %vm904, %v896, 4.0
      %v906 = vsel %vm892, %v905, inf
      %v907 = vrot.slane %v906, 4
      %v908 = vmin.f32 %v906, %v907
      %v909 = vrot.slane %v908, 2
      %v910 = vmin.f32 %v908, %v909
      %v911 = vrot.slane %v910, 1
      %v912 = vmin.f32 %v910, %v911
      %vm913 = vcmp.eq.f32.partialorder %v896, %v912
      %v914 = vsel %vm913, 1, 0
      %v915 = vcvt.s32.f32 %v914
      %917 = vset.pattern.permute.xlu0 0
      %918 = vperm.xlu0 %917, %v915
      %v919 = vpop.permute.xlu0 %918
      %v921 = vmul.f32 %v919, %v666
      %vm922 = vcmask 257024
      %v923 = vsel %vm922, %v921, 0.0
      %v924 = vrot.slane %v923, 4
      %v925 = vadd.f32 %v923, %v924
      %v926 = vrot.slane %v925, 2
      %v927 = vadd.f32 %v925, %v926
      %v928 = vrot.slane %v927, 1
      %v929 = vadd.f32 %v927, %v928
      %vm930 = vcmask 253952
      %931 = vst.msk [vmem:[#allocation2] sm:$0x1] %vm930, %v929
      %p932 = scmp.lt.s32.totalorder %s26, 1
      %s933 = scalar_select %p932, %s26, 1
      %s934 = smul.addr %s933, 4
      %s935 = scalar_lea.vmem %s13, %s934
      // Predicated region
      $region77: #{forward_element.7} parent=71 // pred_check
        %p936 = pneg %p327
      $region78: #{forward_element.7} parent=71 // pred_check_branch
        %938 = sbr.rel (%p936) target = $region80
      $region79: #{forward_element.7} parent=71 // pred_region
        _
      $region80: #{forward_element.7} parent=71 // pred_fallthru
        _
    $region72: #{forward_element.7} parent=5 // pred_fallthru
      _
    %p939 = scmp.le.s32.totalorder 2, %s21
    // Predicated region
    $region81: #{forward_element.7} parent=5 // pred_check
      %p940 = pneg %p939
    $region82: #{forward_element.7} parent=5 // pred_check_branch
      %942 = sbr.rel (%p940) target = $region84
    $region83: #{forward_element.7} parent=5 // pred_region
      %s943 = ssub.s32 %s21, 2
      // Predicated region
      $region85: #{forward_element.7} parent=83 // pred_check
        %p944 = pneg %p333
      $region86: #{forward_element.7} parent=83 // pred_check_branch
        %946 = sbr.rel (%p944) target = $region88
      $region87: #{forward_element.7} parent=83 // pred_region
        %p947 = scmp.lt.s32.totalorder %s27, 1
        %s948 = scalar_select %p947, %s27, 1
        %s949 = smul.addr %s948, 4
        %s950 = scalar_lea.vmem %s13, %s949
      $region88: #{forward_element.7} parent=83 // pred_fallthru
        _
    $region84: #{forward_element.7} parent=5 // pred_fallthru
      _
  $region6: #{forward_element.7} parent=0 // loop_footer
    %s25 = sadd.s32 1, %s21
  $region7: #{forward_element.7} parent=0 // loop_footer_branch
    %20 = sbr.rel target = $region3
  $region8: #{forward_element.7} parent=0 // loop_exit
    _

</llo_original>
